<compile_context>
chip_gen: v7x
topology: tpu7x:2x2x1
jax: 0.10.0
libtpu: 0.0.40
codegen_flags: <defaults>
</compile_context>

<pallas_src>
import functools
import math

import jax
import jax.numpy as jnp
from jax import lax
from jax.experimental import pallas as pl
from jax.experimental.pallas import tpu as pltpu

BN_EPS = 1e-5                       # nn.BatchNorm1d default eps
ACT_DTYPE = jnp.bfloat16            # inter-layer activation storage / matmul operand dtype


def _round_up(x, m):
    return ((x + m - 1) // m) * m


@functools.lru_cache(maxsize=None)
def _vmem_limit_bytes():
    # v7x has 64 MiB physical VMEM vs 128 MiB on v5e/v6e: never scope more than half.
    try:
        cap = pltpu.get_tpu_info().vmem_capacity_bytes
        return int(min(cap // 2, 64 * 1024 * 1024))
    except Exception:
        return 32 * 1024 * 1024


def _conv_out_len(l, kernel, stride, dilation):
    pad = (kernel - 1) * dilation // 2
    return (l + 2 * pad - dilation * (kernel - 1) - 1) // stride + 1


# -----------------------------------------------------------------------------
# Kernel A: hidden layer  —  y = relu(conv1d(bn_affine(x))) + per-channel sum/sumsq
# -----------------------------------------------------------------------------
def _conv_relu_bnstats_kernel(x_ref, w_ref, b_ref, scale_ref, shift_ref,
                              y_ref, sum_ref, ssq_ref, xp_ref,
                              *, K, stride, dilation, pad, l_in, l_out):
    @pl.when(pl.program_id(0) == 0)
    def _():
        sum_ref[...] = jnp.zeros_like(sum_ref)
        ssq_ref[...] = jnp.zeros_like(ssq_ref)

    # Previous layer's BatchNorm applied on the fly; spatial zero padding realised by
    # writing the affine-transformed rows into a zeroed scratch (padded rows stay 0).
    xp_ref[...] = jnp.zeros_like(xp_ref)
    x = x_ref[...].astype(jnp.float32) * scale_ref[...] + shift_ref[...]
    xp_ref[pl.ds(pad, l_in), :] = x

    cout = y_ref.shape[-1]
    acc = jnp.zeros((l_out, cout), jnp.float32)
    for k in range(K):                       # conv as K shifted strided matmuls (no im2col)
        off = k * dilation
        if stride == 1:
            xk = xp_ref[pl.ds(off, l_out), :]
        else:
            xk = xp_ref[pl.ds(off, l_out, stride=stride), :]
        acc += jnp.dot(xk.astype(jnp.bfloat16), w_ref[k],
                       preferred_element_type=jnp.float32)

    y = jnp.maximum(acc + b_ref[...], 0.0)                       # bias + ReLU
    y_ref[...] = y.astype(y_ref.dtype)
    # training-mode BatchNorm1d statistics accumulated on-chip
    sum_ref[...] += jnp.sum(y, axis=0, keepdims=True)
    ssq_ref[...] += jnp.sum(y * y, axis=0, keepdims=True)


def _conv_relu_bnstats(h, w_bf, b2, scale, shift, stride, dilation, pad, l_out):
    B, l_in, cin = h.shape
    K, _, cout = w_bf.shape
    lp = l_in + 2 * pad
    kern = functools.partial(_conv_relu_bnstats_kernel, K=K, stride=stride,
                             dilation=dilation, pad=pad, l_in=l_in, l_out=l_out)
    cost = pl.CostEstimate(
        flops=int(2 * B * l_out * K * cin * cout),
        transcendentals=0,
        bytes_accessed=int(h.size * h.dtype.itemsize + w_bf.size * 2
                           + B * l_out * cout * 2 + 8 * cout),
    )
    return pl.pallas_call(
        kern,
        out_shape=(
            jax.ShapeDtypeStruct((B, l_out, cout), ACT_DTYPE),
            jax.ShapeDtypeStruct((1, cout), jnp.float32),
            jax.ShapeDtypeStruct((1, cout), jnp.float32),
        ),
        grid_spec=pltpu.PrefetchScalarGridSpec(
            num_scalar_prefetch=0,
            grid=(B,),
            in_specs=[
                pl.BlockSpec((None, l_in, cin), lambda b: (b, 0, 0)),   # activation tile
                pl.BlockSpec((K, cin, cout), lambda b: (0, 0, 0)),      # resident weights
                pl.BlockSpec((1, cout), lambda b: (0, 0)),              # resident bias
                pl.BlockSpec((1, cin), lambda b: (0, 0)),               # BN scale
                pl.BlockSpec((1, cin), lambda b: (0, 0)),               # BN shift
            ],
            out_specs=[
                pl.BlockSpec((None, l_out, cout), lambda b: (b, 0, 0)),
                pl.BlockSpec((1, cout), lambda b: (0, 0)),              # sum accumulator
                pl.BlockSpec((1, cout), lambda b: (0, 0)),              # sumsq accumulator
            ],
            scratch_shapes=[pltpu.VMEM((_round_up(lp, 8), cin), jnp.float32)],
        ),
        compiler_params=pltpu.CompilerParams(
            dimension_semantics=("arbitrary",),       # accumulators revisited -> not parallel
            vmem_limit_bytes=_vmem_limit_bytes(),
        ),
        cost_estimate=cost,
    )(h, w_bf, b2, scale, shift)


# -----------------------------------------------------------------------------
# Kernel B: final layer — conv -> split(mean, logvar) -> reparam + KL accumulator
# -----------------------------------------------------------------------------
def _conv_reparam_kernel(x_ref, w_ref, b_ref, scale_ref, shift_ref, eps_ref,
                         z_ref, kl_ref, xp_ref,
                         *, K, stride, dilation, pad, l_in, l_out, dz):
    @pl.when(pl.program_id(0) == 0)
    def _():
        kl_ref[...] = jnp.zeros_like(kl_ref)

    xp_ref[...] = jnp.zeros_like(xp_ref)
    x = x_ref[...].astype(jnp.float32) * scale_ref[...] + shift_ref[...]
    xp_ref[pl.ds(pad, l_in), :] = x

    cout = 2 * dz
    acc = jnp.zeros((l_out, cout), jnp.float32)
    for k in range(K):
        off = k * dilation
        if stride == 1:
            xk = xp_ref[pl.ds(off, l_out), :]
        else:
            xk = xp_ref[pl.ds(off, l_out, stride=stride), :]
        acc += jnp.dot(xk.astype(jnp.bfloat16), w_ref[k],
                       preferred_element_type=jnp.float32)
    out = acc + b_ref[...]

    mean = out[:, :dz]
    logvar = out[:, dz:]
    ev = jnp.exp(logvar)
    z = eps_ref[...].astype(jnp.float32) * ev + mean
    z_ref[...] = z.astype(z_ref.dtype)
    kl = mean * mean + ev - logvar - 1.0
    kl_rows = jnp.sum(kl, axis=1, keepdims=True)                # (l_out, 1)
    kl_ref[...] += jnp.sum(kl_rows, axis=0, keepdims=True)      # (1, 1) accumulator


def _conv_reparam(h, w_bf, b2, scale, shift, eps, stride, dilation, pad, l_out, dz):
    B, l_in, cin = h.shape
    K, _, cout = w_bf.shape
    lp = l_in + 2 * pad
    kern = functools.partial(_conv_reparam_kernel, K=K, stride=stride, dilation=dilation,
                             pad=pad, l_in=l_in, l_out=l_out, dz=dz)
    cost = pl.CostEstimate(
        flops=int(2 * B * l_out * K * cin * cout + 6 * B * l_out * dz),
        transcendentals=int(B * l_out * dz),
        bytes_accessed=int(h.size * h.dtype.itemsize + w_bf.size * 2
                           + eps.size * 4 + B * l_out * dz * 4),
    )
    return pl.pallas_call(
        kern,
        out_shape=(
            jax.ShapeDtypeStruct((B, l_out, dz), jnp.float32),
            jax.ShapeDtypeStruct((1, 1), jnp.float32),
        ),
        grid_spec=pltpu.PrefetchScalarGridSpec(
            num_scalar_prefetch=0,
            grid=(B,),
            in_specs=[
                pl.BlockSpec((None, l_in, cin), lambda b: (b, 0, 0)),
                pl.BlockSpec((K, cin, cout), lambda b: (0, 0, 0)),
                pl.BlockSpec((1, cout), lambda b: (0, 0)),
                pl.BlockSpec((1, cin), lambda b: (0, 0)),
                pl.BlockSpec((1, cin), lambda b: (0, 0)),
                pl.BlockSpec((None, l_out, dz), lambda b: (b, 0, 0)),   # eps (noise)
            ],
            out_specs=[
                pl.BlockSpec((None, l_out, dz), lambda b: (b, 0, 0)),   # z
                pl.BlockSpec((1, 1), lambda b: (0, 0)),                 # KL accumulator
            ],
            scratch_shapes=[pltpu.VMEM((_round_up(lp, 8), cin), jnp.float32)],
        ),
        compiler_params=pltpu.CompilerParams(
            dimension_semantics=("arbitrary",),
            vmem_limit_bytes=_vmem_limit_bytes(),
        ),
        cost_estimate=cost,
    )(h, w_bf, b2, scale, shift, eps)


# -----------------------------------------------------------------------------
# Parameter init + full forward (JAX glue is only transposes and O(C) BN scalar math)
# -----------------------------------------------------------------------------
def init_encoder_params(key, in_dim, hidden_dim, out_dim, kernel, dilation, stride):
    n_conv = len(stride)
    channels = [in_dim] + (n_conv - 1) * [hidden_dim] + [out_dim * 2]
    if isinstance(dilation, int):
        dilation = [dilation] * n_conv
    params = []
    for i in range(n_conv):
        cin, cout = channels[i], channels[i + 1]
        kw, kb = jax.random.split(jax.random.fold_in(key, i))
        bound = 1.0 / math.sqrt(cin * kernel)
        layer = dict(
            w=jax.random.uniform(kw, (kernel, cin, cout), jnp.float32, -bound, bound),
            b=jax.random.uniform(kb, (cout,), jnp.float32, -bound, bound),
            stride=stride[i],
            dilation=dilation[i],
        )
        if i != n_conv - 1:
            layer["gamma"] = jnp.ones((cout,), jnp.float32)   # BatchNorm1d default init
            layer["beta"] = jnp.zeros((cout,), jnp.float32)
        params.append(layer)
    return params


def encoder_forward_pallas(x, params, noise, out_dim):
    """x: [B, in_dim, L] (PyTorch NCL), noise: [B, out_dim, L_final].
    Returns (z [B, out_dim, L_final], kl_mean scalar)."""
    B = x.shape[0]
    n_conv = len(params)
    h = jnp.transpose(x, (0, 2, 1)).astype(ACT_DTYPE)       # [B, L, C], bf16 storage
    scale = jnp.ones((1, h.shape[-1]), jnp.float32)         # identity affine for layer 0
    shift = jnp.zeros((1, h.shape[-1]), jnp.float32)

    z = None
    kl_mean = None
    for i, layer in enumerate(params):
        K, cin, cout = layer["w"].shape
        s, d = layer["stride"], layer["dilation"]
        pad = (K - 1) * d // 2
        l_in = h.shape[1]
        l_out = (l_in + 2 * pad - d * (K - 1) - 1) // s + 1
        w_bf = layer["w"].astype(jnp.bfloat16)               # bf16 MXU operands
        b2 = layer["b"].reshape(1, cout).astype(jnp.float32)

        if i < n_conv - 1:
            h, csum, cssq = _conv_relu_bnstats(h, w_bf, b2, scale, shift, s, d, pad, l_out)
            # Training-mode BatchNorm1d stats from the on-chip sums (tiny [C] math);
            # the affine is applied inside the NEXT layer's kernel (no extra HBM pass).
            n = B * l_out
            mu = csum[0] / n
            var = jnp.maximum(cssq[0] / n - mu * mu, 0.0)     # biased var, like PyTorch
            sc = layer["gamma"] * lax.rsqrt(var + BN_EPS)
            scale = sc.reshape(1, cout)
            shift = (layer["beta"] - mu * sc).reshape(1, cout)
        else:
            eps = jnp.transpose(noise, (0, 2, 1)).astype(jnp.float32)   # [B, L_f, Dz]
            z_bld, kl_sum = _conv_reparam(h, w_bf, b2, scale, shift, eps,
                                          s, d, pad, l_out, out_dim)
            kl_mean = kl_sum[0, 0] / (B * l_out * out_dim)
            z = jnp.transpose(z_bld, (0, 2, 1))               # back to [B, Dz, L_f]
    return z, kl_mean


def encoder_reference(x, params, noise, out_dim):
    """Pure-JAX reference (f32) with identical semantics."""
    h = x.astype(jnp.float32)
    n_conv = len(params)
    for i, layer in enumerate(params):
        K = layer["w"].shape[0]
        s, d = layer["stride"], layer["dilation"]
        pad = (K - 1) * d // 2
        w_oih = jnp.transpose(layer["w"], (2, 1, 0))               # [Cout, Cin, K]
        h = lax.conv_general_dilated(
            h, w_oih, window_strides=(s,), padding=[(pad, pad)],
            rhs_dilation=(d,), dimension_numbers=("NCH", "OIH", "NCH"))
        h = h + layer["b"][None, :, None]
        if i != n_conv - 1:
            h = jnp.maximum(h, 0.0)
            mu = jnp.mean(h, axis=(0, 2), keepdims=True)
            var = jnp.var(h, axis=(0, 2), keepdims=True)
            h = ((h - mu) * lax.rsqrt(var + BN_EPS)
                 * layer["gamma"][None, :, None] + layer["beta"][None, :, None])
    mean, logvar = h[:, :out_dim, :], h[:, out_dim:, :]
    z = noise * jnp.exp(logvar) + mean
    kl = mean ** 2 + jnp.exp(logvar) - logvar - 1.0
    return z, kl.mean(), mean, logvar


if __name__ == "__main__":
    key = jax.random.PRNGKey(0)
    kx, kp, kn = jax.random.split(key, 3)

    B, L = 2, 64
    in_dim, hidden_dim, out_dim = 4, 32, 16
    kernel = 3
    stride = [2, 2, 1]
    dilation = [1, 2, 1]

    params = init_encoder_params(kp, in_dim, hidden_dim, out_dim, kernel, dilation, stride)
    x = jax.random.normal(kx, (B, in_dim, L), jnp.float32)

    l_f = L
    for s, d in zip(stride, dilation):
        l_f = _conv_out_len(l_f, kernel, s, d)
    # torch.randn_like(mean) equivalent, generated outside the kernel and shared with the
    # reference so the outputs are directly comparable.
    noise = jax.random.normal(kn, (B, out_dim, l_f), jnp.float32)

    fwd = jax.jit(lambda xs, ns: encoder_forward_pallas(xs, params, ns, out_dim))
    z, kl = jax.block_until_ready(fwd(x, noise))

    z_ref, kl_ref, mean_ref, logvar_ref = encoder_reference(x, params, noise, out_dim)
    assert z.shape == (B, out_dim, l_f)

    # bf16 matmul operands + bf16 activation storage -> loosened, scale-aware tolerance.
    denom = 1.0 + jnp.abs(mean_ref) + jnp.abs(noise) * jnp.exp(logvar_ref)
    z_err = float(jnp.max(jnp.abs(z - z_ref) / denom))
    assert z_err < 0.1, f"z mismatch vs reference (scaled err {z_err})"
    kl_err = abs(float(kl) - float(kl_ref))
    assert kl_err < 0.05 + 0.05 * abs(float(kl_ref)), f"kl mismatch (err {kl_err})"

    print("KERNEL_OK")
</pallas_src>

<mosaic_0001>
module attributes {stable_mosaic.version = 11 : i64} {
  func.func @_conv_relu_bnstats_kernel(%arg0: i32, %arg1: memref<1x64x4xbf16, #tpu.memory_space<vmem>>, %arg2: memref<3x4x32xbf16, #tpu.memory_space<vmem>>, %arg3: memref<1x32xf32, #tpu.memory_space<vmem>>, %arg4: memref<1x4xf32, #tpu.memory_space<vmem>>, %arg5: memref<1x4xf32, #tpu.memory_space<vmem>>, %arg6: memref<1x32x32xbf16, #tpu.memory_space<vmem>>, %arg7: memref<1x32xf32, #tpu.memory_space<vmem>>, %arg8: memref<1x32xf32, #tpu.memory_space<vmem>>, %arg9: memref<72x4xf32, #tpu.memory_space<vmem>>) attributes {dimension_semantics = [#tpu.dimension_semantics<arbitrary>], iteration_bounds = array<i64: 2>, scalar_prefetch = 0 : i64, scratch_operands = 1 : i64, tpu.core_type = #tpu.core_type<tc>, window_params = [{transform_indices = @transform_0, window_bounds = array<i64: 1, 64, 4>}, {pipeline_mode = #tpu.pipeline_mode<synchronous>, transform_indices = @transform_1, window_bounds = array<i64: 3, 4, 32>}, {pipeline_mode = #tpu.pipeline_mode<synchronous>, transform_indices = @transform_2, window_bounds = array<i64: 1, 32>}, {pipeline_mode = #tpu.pipeline_mode<synchronous>, transform_indices = @transform_3, window_bounds = array<i64: 1, 4>}, {pipeline_mode = #tpu.pipeline_mode<synchronous>, transform_indices = @transform_4, window_bounds = array<i64: 1, 4>}, {transform_indices = @transform_5, window_bounds = array<i64: 1, 32, 32>}, {pipeline_mode = #tpu.pipeline_mode<synchronous>, transform_indices = @transform_6, window_bounds = array<i64: 1, 32>}, {pipeline_mode = #tpu.pipeline_mode<synchronous>, transform_indices = @transform_7, window_bounds = array<i64: 1, 32>}]} {
    %c0_i32 = arith.constant 0 : i32
    %0 = arith.cmpi eq, %arg0, %c0_i32 : i32
    %1 = arith.extui %0 : i1 to i32
    %c0_i32_0 = arith.constant 0 : i32
    %2 = arith.cmpi ne, %1, %c0_i32_0 : i32
    scf.if %2 {
      %cst_44 = arith.constant 0.000000e+00 : f32
      %54 = vector.broadcast %cst_44 : f32 to vector<1x32xf32>
      %c0_45 = arith.constant 0 : index
      %c0_46 = arith.constant 0 : index
      %55 = vector.load %arg7[%c0_45, %c0_46] : memref<1x32xf32, #tpu.memory_space<vmem>>, vector<1x32xf32>
      tpu.vector_store %arg7[%c0_45, %c0_46], %54 {strides = array<i32>} : memref<1x32xf32, #tpu.memory_space<vmem>>, vector<1x32xf32>,
      %cst_47 = arith.constant 0.000000e+00 : f32
      %56 = vector.broadcast %cst_47 : f32 to vector<1x32xf32>
      %c0_48 = arith.constant 0 : index
      %c0_49 = arith.constant 0 : index
      %57 = vector.load %arg8[%c0_48, %c0_49] : memref<1x32xf32, #tpu.memory_space<vmem>>, vector<1x32xf32>
      tpu.vector_store %arg8[%c0_48, %c0_49], %56 {strides = array<i32>} : memref<1x32xf32, #tpu.memory_space<vmem>>, vector<1x32xf32>,
    } else {
    }
    %cst = arith.constant 0.000000e+00 : f32
    %3 = vector.broadcast %cst : f32 to vector<72x4xf32>
    %c0 = arith.constant 0 : index
    %c0_1 = arith.constant 0 : index
    %4 = vector.load %arg9[%c0, %c0_1] : memref<72x4xf32, #tpu.memory_space<vmem>>, vector<72x4xf32>
    tpu.vector_store %arg9[%c0, %c0_1], %3 {strides = array<i32>} : memref<72x4xf32, #tpu.memory_space<vmem>>, vector<72x4xf32>,
    %c0_2 = arith.constant 0 : index
    %c0_3 = arith.constant 0 : index
    %c0_4 = arith.constant 0 : index
    %5 = vector.load %arg1[%c0_2, %c0_3, %c0_4] : memref<1x64x4xbf16, #tpu.memory_space<vmem>>, vector<1x64x4xbf16>
    %6 = vector.shape_cast %5 : vector<1x64x4xbf16> to vector<64x4xbf16>
    %7 = arith.extf %6 : vector<64x4xbf16> to vector<64x4xf32>
    %c0_5 = arith.constant 0 : index
    %c0_6 = arith.constant 0 : index
    %8 = vector.load %arg4[%c0_5, %c0_6] : memref<1x4xf32, #tpu.memory_space<vmem>>, vector<1x4xf32>
    %9 = vector.broadcast %8 : vector<1x4xf32> to vector<64x4xf32>
    %10 = arith.mulf %7, %9 : vector<64x4xf32>
    %c0_7 = arith.constant 0 : index
    %c0_8 = arith.constant 0 : index
    %11 = vector.load %arg5[%c0_7, %c0_8] : memref<1x4xf32, #tpu.memory_space<vmem>>, vector<1x4xf32>
    %12 = vector.broadcast %11 : vector<1x4xf32> to vector<64x4xf32>
    %13 = arith.addf %10, %12 : vector<64x4xf32>
    %c1 = arith.constant 1 : index
    %c0_9 = arith.constant 0 : index
    %14 = vector.load %arg9[%c1, %c0_9] : memref<72x4xf32, #tpu.memory_space<vmem>>, vector<64x4xf32>
    tpu.vector_store %arg9[%c1, %c0_9], %13 {strides = array<i32>} : memref<72x4xf32, #tpu.memory_space<vmem>>, vector<64x4xf32>,
    %cst_10 = arith.constant 0.000000e+00 : f32
    %15 = vector.broadcast %cst_10 : f32 to vector<32x32xf32>
    %c0_11 = arith.constant 0 : index
    %c0_12 = arith.constant 0 : index
    %16 = tpu.strided_load %arg9[%c0_11, %c0_12] {strides = array<i32: 2, 1>} : memref<72x4xf32, #tpu.memory_space<vmem>>, vector<32x4xf32>
    %17 = arith.truncf %16 : vector<32x4xf32> to vector<32x4xbf16>
    %c0_13 = arith.constant 0 : index
    %c0_14 = arith.constant 0 : index
    %c0_15 = arith.constant 0 : index
    %18 = vector.load %arg2[%c0_13, %c0_14, %c0_15] : memref<3x4x32xbf16, #tpu.memory_space<vmem>>, vector<1x4x32xbf16>
    %19 = vector.shape_cast %18 : vector<1x4x32xbf16> to vector<4x32xbf16>
    %cst_16 = arith.constant dense<0.000000e+00> : vector<32x32xf32>
    %20 = tpu.matmul %17, %19, %cst_16 {dimension_numbers = #tpu.dot_dimension_numbers<[1], [0], [0], [1], [0, 0, 1, 1], [], []>} : vector<32x4xbf16>, vector<4x32xbf16>, vector<32x32xf32> -> vector<32x32xf32>
    %21 = arith.addf %15, %20 : vector<32x32xf32>
    %c1_17 = arith.constant 1 : index
    %c0_18 = arith.constant 0 : index
    %22 = tpu.strided_load %arg9[%c1_17, %c0_18] {strides = array<i32: 2, 1>} : memref<72x4xf32, #tpu.memory_space<vmem>>, vector<32x4xf32>
    %23 = arith.truncf %22 : vector<32x4xf32> to vector<32x4xbf16>
    %c1_19 = arith.constant 1 : index
    %c0_20 = arith.constant 0 : index
    %c0_21 = arith.constant 0 : index
    %24 = vector.load %arg2[%c1_19, %c0_20, %c0_21] : memref<3x4x32xbf16, #tpu.memory_space<vmem>>, vector<1x4x32xbf16>
    %25 = vector.shape_cast %24 : vector<1x4x32xbf16> to vector<4x32xbf16>
    %cst_22 = arith.constant dense<0.000000e+00> : vector<32x32xf32>
    %26 = tpu.matmul %23, %25, %cst_22 {dimension_numbers = #tpu.dot_dimension_numbers<[1], [0], [0], [1], [0, 0, 1, 1], [], []>} : vector<32x4xbf16>, vector<4x32xbf16>, vector<32x32xf32> -> vector<32x32xf32>
    %27 = arith.addf %21, %26 : vector<32x32xf32>
    %c2 = arith.constant 2 : index
    %c0_23 = arith.constant 0 : index
    %28 = tpu.strided_load %arg9[%c2, %c0_23] {strides = array<i32: 2, 1>} : memref<72x4xf32, #tpu.memory_space<vmem>>, vector<32x4xf32>
    %29 = arith.truncf %28 : vector<32x4xf32> to vector<32x4xbf16>
    %c2_24 = arith.constant 2 : index
    %c0_25 = arith.constant 0 : index
    %c0_26 = arith.constant 0 : index
    %30 = vector.load %arg2[%c2_24, %c0_25, %c0_26] : memref<3x4x32xbf16, #tpu.memory_space<vmem>>, vector<1x4x32xbf16>
    %31 = vector.shape_cast %30 : vector<1x4x32xbf16> to vector<4x32xbf16>
    %cst_27 = arith.constant dense<0.000000e+00> : vector<32x32xf32>
    %32 = tpu.matmul %29, %31, %cst_27 {dimension_numbers = #tpu.dot_dimension_numbers<[1], [0], [0], [1], [0, 0, 1, 1], [], []>} : vector<32x4xbf16>, vector<4x32xbf16>, vector<32x32xf32> -> vector<32x32xf32>
    %33 = arith.addf %27, %32 : vector<32x32xf32>
    %c0_28 = arith.constant 0 : index
    %c0_29 = arith.constant 0 : index
    %34 = vector.load %arg3[%c0_28, %c0_29] : memref<1x32xf32, #tpu.memory_space<vmem>>, vector<1x32xf32>
    %35 = vector.broadcast %34 : vector<1x32xf32> to vector<32x32xf32>
    %36 = arith.addf %33, %35 : vector<32x32xf32>
    %cst_30 = arith.constant 0.000000e+00 : f32
    %37 = vector.broadcast %cst_30 : f32 to vector<32x32xf32>
    %38 = arith.maximumf %36, %37 : vector<32x32xf32>
    %39 = arith.truncf %38 : vector<32x32xf32> to vector<32x32xbf16>
    %c0_31 = arith.constant 0 : index
    %c0_32 = arith.constant 0 : index
    %c0_33 = arith.constant 0 : index
    %40 = vector.load %arg6[%c0_31, %c0_32, %c0_33] : memref<1x32x32xbf16, #tpu.memory_space<vmem>>, vector<1x32x32xbf16>
    %41 = vector.shape_cast %40 : vector<1x32x32xbf16> to vector<32x32xbf16>
    %42 = vector.shape_cast %39 : vector<32x32xbf16> to vector<1x32x32xbf16>
    tpu.vector_store %arg6[%c0_31, %c0_32, %c0_33], %42 {strides = array<i32>} : memref<1x32x32xbf16, #tpu.memory_space<vmem>>, vector<1x32x32xbf16>,
    %c0_34 = arith.constant 0 : index
    %c0_35 = arith.constant 0 : index
    %43 = vector.load %arg7[%c0_34, %c0_35] : memref<1x32xf32, #tpu.memory_space<vmem>>, vector<1x32xf32>
    %cst_36 = arith.constant dense<0.000000e+00> : vector<32xf32>
    %44 = vector.multi_reduction <add>, %38, %cst_36 [0] : vector<32x32xf32> to vector<32xf32>
    %45 = vector.shape_cast %44 : vector<32xf32> to vector<1x32xf32>
    %46 = arith.addf %43, %45 : vector<1x32xf32>
    %c0_37 = arith.constant 0 : index
    %c0_38 = arith.constant 0 : index
    %47 = vector.load %arg7[%c0_37, %c0_38] : memref<1x32xf32, #tpu.memory_space<vmem>>, vector<1x32xf32>
    tpu.vector_store %arg7[%c0_37, %c0_38], %46 {strides = array<i32>} : memref<1x32xf32, #tpu.memory_space<vmem>>, vector<1x32xf32>,
    %c0_39 = arith.constant 0 : index
    %c0_40 = arith.constant 0 : index
    %48 = vector.load %arg8[%c0_39, %c0_40] : memref<1x32xf32, #tpu.memory_space<vmem>>, vector<1x32xf32>
    %49 = arith.mulf %38, %38 : vector<32x32xf32>
    %cst_41 = arith.constant dense<0.000000e+00> : vector<32xf32>
    %50 = vector.multi_reduction <add>, %49, %cst_41 [0] : vector<32x32xf32> to vector<32xf32>
    %51 = vector.shape_cast %50 : vector<32xf32> to vector<1x32xf32>
    %52 = arith.addf %48, %51 : vector<1x32xf32>
    %c0_42 = arith.constant 0 : index
    %c0_43 = arith.constant 0 : index
    %53 = vector.load %arg8[%c0_42, %c0_43] : memref<1x32xf32, #tpu.memory_space<vmem>>, vector<1x32xf32>
    tpu.vector_store %arg8[%c0_42, %c0_43], %52 {strides = array<i32>} : memref<1x32xf32, #tpu.memory_space<vmem>>, vector<1x32xf32>,
    return
  }
  func.func @transform_0(%arg0: i32) -> (i32, i32, i32) {
    %c0_i32 = arith.constant 0 : i32
    %c0_i32_0 = arith.constant 0 : i32
    %c0_i32_1 = arith.constant 0 : i32
    return %arg0, %c0_i32, %c0_i32_0 : i32, i32, i32
  }
  func.func @transform_1(%arg0: i32) -> (i32, i32, i32) {
    %c0_i32 = arith.constant 0 : i32
    %c0_i32_0 = arith.constant 0 : i32
    %c0_i32_1 = arith.constant 0 : i32
    %c0_i32_2 = arith.constant 0 : i32
    return %c0_i32, %c0_i32_0, %c0_i32_1 : i32, i32, i32
  }
  func.func @transform_2(%arg0: i32) -> (i32, i32) {
    %c0_i32 = arith.constant 0 : i32
    %c0_i32_0 = arith.constant 0 : i32
    %c0_i32_1 = arith.constant 0 : i32
    return %c0_i32, %c0_i32_0 : i32, i32
  }
  func.func @transform_3(%arg0: i32) -> (i32, i32) {
    %c0_i32 = arith.constant 0 : i32
    %c0_i32_0 = arith.constant 0 : i32
    %c0_i32_1 = arith.constant 0 : i32
    return %c0_i32, %c0_i32_0 : i32, i32
  }
  func.func @transform_4(%arg0: i32) -> (i32, i32) {
    %c0_i32 = arith.constant 0 : i32
    %c0_i32_0 = arith.constant 0 : i32
    %c0_i32_1 = arith.constant 0 : i32
    return %c0_i32, %c0_i32_0 : i32, i32
  }
  func.func @transform_5(%arg0: i32) -> (i32, i32, i32) {
    %c0_i32 = arith.constant 0 : i32
    %c0_i32_0 = arith.constant 0 : i32
    %c0_i32_1 = arith.constant 0 : i32
    return %arg0, %c0_i32, %c0_i32_0 : i32, i32, i32
  }
  func.func @transform_6(%arg0: i32) -> (i32, i32) {
    %c0_i32 = arith.constant 0 : i32
    %c0_i32_0 = arith.constant 0 : i32
    %c0_i32_1 = arith.constant 0 : i32
    return %c0_i32, %c0_i32_0 : i32, i32
  }
  func.func @transform_7(%arg0: i32) -> (i32, i32) {
    %c0_i32 = arith.constant 0 : i32
    %c0_i32_0 = arith.constant 0 : i32
    %c0_i32_1 = arith.constant 0 : i32
    return %c0_i32, %c0_i32_0 : i32, i32
  }
}

module attributes {stable_mosaic.version = 11 : i64} {
  func.func @_conv_relu_bnstats_kernel(%arg0: i32, %arg1: memref<1x32x32xbf16, #tpu.memory_space<vmem>>, %arg2: memref<3x32x32xbf16, #tpu.memory_space<vmem>>, %arg3: memref<1x32xf32, #tpu.memory_space<vmem>>, %arg4: memref<1x32xf32, #tpu.memory_space<vmem>>, %arg5: memref<1x32xf32, #tpu.memory_space<vmem>>, %arg6: memref<1x16x32xbf16, #tpu.memory_space<vmem>>, %arg7: memref<1x32xf32, #tpu.memory_space<vmem>>, %arg8: memref<1x32xf32, #tpu.memory_space<vmem>>, %arg9: memref<40x32xf32, #tpu.memory_space<vmem>>) attributes {dimension_semantics = [#tpu.dimension_semantics<arbitrary>], iteration_bounds = array<i64: 2>, scalar_prefetch = 0 : i64, scratch_operands = 1 : i64, tpu.core_type = #tpu.core_type<tc>, window_params = [{transform_indices = @transform_0, window_bounds = array<i64: 1, 32, 32>}, {pipeline_mode = #tpu.pipeline_mode<synchronous>, transform_indices = @transform_1, window_bounds = array<i64: 3, 32, 32>}, {pipeline_mode = #tpu.pipeline_mode<synchronous>, transform_indices = @transform_2, window_bounds = array<i64: 1, 32>}, {pipeline_mode = #tpu.pipeline_mode<synchronous>, transform_indices = @transform_3, window_bounds = array<i64: 1, 32>}, {pipeline_mode = #tpu.pipeline_mode<synchronous>, transform_indices = @transform_4, window_bounds = array<i64: 1, 32>}, {transform_indices = @transform_5, window_bounds = array<i64: 1, 16, 32>}, {pipeline_mode = #tpu.pipeline_mode<synchronous>, transform_indices = @transform_6, window_bounds = array<i64: 1, 32>}, {pipeline_mode = #tpu.pipeline_mode<synchronous>, transform_indices = @transform_7, window_bounds = array<i64: 1, 32>}]} {
    %c0_i32 = arith.constant 0 : i32
    %0 = arith.cmpi eq, %arg0, %c0_i32 : i32
    %1 = arith.extui %0 : i1 to i32
    %c0_i32_0 = arith.constant 0 : i32
    %2 = arith.cmpi ne, %1, %c0_i32_0 : i32
    scf.if %2 {
      %cst_43 = arith.constant 0.000000e+00 : f32
      %54 = vector.broadcast %cst_43 : f32 to vector<1x32xf32>
      %c0_44 = arith.constant 0 : index
      %c0_45 = arith.constant 0 : index
      %55 = vector.load %arg7[%c0_44, %c0_45] : memref<1x32xf32, #tpu.memory_space<vmem>>, vector<1x32xf32>
      tpu.vector_store %arg7[%c0_44, %c0_45], %54 {strides = array<i32>} : memref<1x32xf32, #tpu.memory_space<vmem>>, vector<1x32xf32>,
      %cst_46 = arith.constant 0.000000e+00 : f32
      %56 = vector.broadcast %cst_46 : f32 to vector<1x32xf32>
      %c0_47 = arith.constant 0 : index
      %c0_48 = arith.constant 0 : index
      %57 = vector.load %arg8[%c0_47, %c0_48] : memref<1x32xf32, #tpu.memory_space<vmem>>, vector<1x32xf32>
      tpu.vector_store %arg8[%c0_47, %c0_48], %56 {strides = array<i32>} : memref<1x32xf32, #tpu.memory_space<vmem>>, vector<1x32xf32>,
    } else {
    }
    %cst = arith.constant 0.000000e+00 : f32
    %3 = vector.broadcast %cst : f32 to vector<40x32xf32>
    %c0 = arith.constant 0 : index
    %c0_1 = arith.constant 0 : index
    %4 = vector.load %arg9[%c0, %c0_1] : memref<40x32xf32, #tpu.memory_space<vmem>>, vector<40x32xf32>
    tpu.vector_store %arg9[%c0, %c0_1], %3 {strides = array<i32>} : memref<40x32xf32, #tpu.memory_space<vmem>>, vector<40x32xf32>,
    %c0_2 = arith.constant 0 : index
    %c0_3 = arith.constant 0 : index
    %c0_4 = arith.constant 0 : index
    %5 = vector.load %arg1[%c0_2, %c0_3, %c0_4] : memref<1x32x32xbf16, #tpu.memory_space<vmem>>, vector<1x32x32xbf16>
    %6 = vector.shape_cast %5 : vector<1x32x32xbf16> to vector<32x32xbf16>
    %7 = arith.extf %6 : vector<32x32xbf16> to vector<32x32xf32>
    %c0_5 = arith.constant 0 : index
    %c0_6 = arith.constant 0 : index
    %8 = vector.load %arg4[%c0_5, %c0_6] : memref<1x32xf32, #tpu.memory_space<vmem>>, vector<1x32xf32>
    %9 = vector.broadcast %8 : vector<1x32xf32> to vector<32x32xf32>
    %10 = arith.mulf %7, %9 : vector<32x32xf32>
    %c0_7 = arith.constant 0 : index
    %c0_8 = arith.constant 0 : index
    %11 = vector.load %arg5[%c0_7, %c0_8] : memref<1x32xf32, #tpu.memory_space<vmem>>, vector<1x32xf32>
    %12 = vector.broadcast %11 : vector<1x32xf32> to vector<32x32xf32>
    %13 = arith.addf %10, %12 : vector<32x32xf32>
    %c2 = arith.constant 2 : index
    %c0_9 = arith.constant 0 : index
    %14 = vector.load %arg9[%c2, %c0_9] : memref<40x32xf32, #tpu.memory_space<vmem>>, vector<32x32xf32>
    tpu.vector_store %arg9[%c2, %c0_9], %13 {strides = array<i32>} : memref<40x32xf32, #tpu.memory_space<vmem>>, vector<32x32xf32>,
    %cst_10 = arith.constant 0.000000e+00 : f32
    %15 = vector.broadcast %cst_10 : f32 to vector<16x32xf32>
    %c0_11 = arith.constant 0 : index
    %c0_12 = arith.constant 0 : index
    %16 = tpu.strided_load %arg9[%c0_11, %c0_12] {strides = array<i32: 2, 1>} : memref<40x32xf32, #tpu.memory_space<vmem>>, vector<16x32xf32>
    %17 = arith.truncf %16 : vector<16x32xf32> to vector<16x32xbf16>
    %c0_13 = arith.constant 0 : index
    %c0_14 = arith.constant 0 : index
    %c0_15 = arith.constant 0 : index
    %18 = vector.load %arg2[%c0_13, %c0_14, %c0_15] : memref<3x32x32xbf16, #tpu.memory_space<vmem>>, vector<1x32x32xbf16>
    %19 = vector.shape_cast %18 : vector<1x32x32xbf16> to vector<32x32xbf16>
    %cst_16 = arith.constant dense<0.000000e+00> : vector<16x32xf32>
    %20 = tpu.matmul %17, %19, %cst_16 {dimension_numbers = #tpu.dot_dimension_numbers<[1], [0], [0], [1], [0, 0, 1, 1], [], []>} : vector<16x32xbf16>, vector<32x32xbf16>, vector<16x32xf32> -> vector<16x32xf32>
    %21 = arith.addf %15, %20 : vector<16x32xf32>
    %c2_17 = arith.constant 2 : index
    %c0_18 = arith.constant 0 : index
    %22 = tpu.strided_load %arg9[%c2_17, %c0_18] {strides = array<i32: 2, 1>} : memref<40x32xf32, #tpu.memory_space<vmem>>, vector<16x32xf32>
    %23 = arith.truncf %22 : vector<16x32xf32> to vector<16x32xbf16>
    %c1 = arith.constant 1 : index
    %c0_19 = arith.constant 0 : index
    %c0_20 = arith.constant 0 : index
    %24 = vector.load %arg2[%c1, %c0_19, %c0_20] : memref<3x32x32xbf16, #tpu.memory_space<vmem>>, vector<1x32x32xbf16>
    %25 = vector.shape_cast %24 : vector<1x32x32xbf16> to vector<32x32xbf16>
    %cst_21 = arith.constant dense<0.000000e+00> : vector<16x32xf32>
    %26 = tpu.matmul %23, %25, %cst_21 {dimension_numbers = #tpu.dot_dimension_numbers<[1], [0], [0], [1], [0, 0, 1, 1], [], []>} : vector<16x32xbf16>, vector<32x32xbf16>, vector<16x32xf32> -> vector<16x32xf32>
    %27 = arith.addf %21, %26 : vector<16x32xf32>
    %c4 = arith.constant 4 : index
    %c0_22 = arith.constant 0 : index
    %28 = tpu.strided_load %arg9[%c4, %c0_22] {strides = array<i32: 2, 1>} : memref<40x32xf32, #tpu.memory_space<vmem>>, vector<16x32xf32>
    %29 = arith.truncf %28 : vector<16x32xf32> to vector<16x32xbf16>
    %c2_23 = arith.constant 2 : index
    %c0_24 = arith.constant 0 : index
    %c0_25 = arith.constant 0 : index
    %30 = vector.load %arg2[%c2_23, %c0_24, %c0_25] : memref<3x32x32xbf16, #tpu.memory_space<vmem>>, vector<1x32x32xbf16>
    %31 = vector.shape_cast %30 : vector<1x32x32xbf16> to vector<32x32xbf16>
    %cst_26 = arith.constant dense<0.000000e+00> : vector<16x32xf32>
    %32 = tpu.matmul %29, %31, %cst_26 {dimension_numbers = #tpu.dot_dimension_numbers<[1], [0], [0], [1], [0, 0, 1, 1], [], []>} : vector<16x32xbf16>, vector<32x32xbf16>, vector<16x32xf32> -> vector<16x32xf32>
    %33 = arith.addf %27, %32 : vector<16x32xf32>
    %c0_27 = arith.constant 0 : index
    %c0_28 = arith.constant 0 : index
    %34 = vector.load %arg3[%c0_27, %c0_28] : memref<1x32xf32, #tpu.memory_space<vmem>>, vector<1x32xf32>
    %35 = vector.broadcast %34 : vector<1x32xf32> to vector<16x32xf32>
    %36 = arith.addf %33, %35 : vector<16x32xf32>
    %cst_29 = arith.constant 0.000000e+00 : f32
    %37 = vector.broadcast %cst_29 : f32 to vector<16x32xf32>
    %38 = arith.maximumf %36, %37 : vector<16x32xf32>
    %39 = arith.truncf %38 : vector<16x32xf32> to vector<16x32xbf16>
    %c0_30 = arith.constant 0 : index
    %c0_31 = arith.constant 0 : index
    %c0_32 = arith.constant 0 : index
    %40 = vector.load %arg6[%c0_30, %c0_31, %c0_32] : memref<1x16x32xbf16, #tpu.memory_space<vmem>>, vector<1x16x32xbf16>
    %41 = vector.shape_cast %40 : vector<1x16x32xbf16> to vector<16x32xbf16>
    %42 = vector.shape_cast %39 : vector<16x32xbf16> to vector<1x16x32xbf16>
    tpu.vector_store %arg6[%c0_30, %c0_31, %c0_32], %42 {strides = array<i32>} : memref<1x16x32xbf16, #tpu.memory_space<vmem>>, vector<1x16x32xbf16>,
    %c0_33 = arith.constant 0 : index
    %c0_34 = arith.constant 0 : index
    %43 = vector.load %arg7[%c0_33, %c0_34] : memref<1x32xf32, #tpu.memory_space<vmem>>, vector<1x32xf32>
    %cst_35 = arith.constant dense<0.000000e+00> : vector<32xf32>
    %44 = vector.multi_reduction <add>, %38, %cst_35 [0] : vector<16x32xf32> to vector<32xf32>
    %45 = vector.shape_cast %44 : vector<32xf32> to vector<1x32xf32>
    %46 = arith.addf %43, %45 : vector<1x32xf32>
    %c0_36 = arith.constant 0 : index
    %c0_37 = arith.constant 0 : index
    %47 = vector.load %arg7[%c0_36, %c0_37] : memref<1x32xf32, #tpu.memory_space<vmem>>, vector<1x32xf32>
    tpu.vector_store %arg7[%c0_36, %c0_37], %46 {strides = array<i32>} : memref<1x32xf32, #tpu.memory_space<vmem>>, vector<1x32xf32>,
    %c0_38 = arith.constant 0 : index
    %c0_39 = arith.constant 0 : index
    %48 = vector.load %arg8[%c0_38, %c0_39] : memref<1x32xf32, #tpu.memory_space<vmem>>, vector<1x32xf32>
    %49 = arith.mulf %38, %38 : vector<16x32xf32>
    %cst_40 = arith.constant dense<0.000000e+00> : vector<32xf32>
    %50 = vector.multi_reduction <add>, %49, %cst_40 [0] : vector<16x32xf32> to vector<32xf32>
    %51 = vector.shape_cast %50 : vector<32xf32> to vector<1x32xf32>
    %52 = arith.addf %48, %51 : vector<1x32xf32>
    %c0_41 = arith.constant 0 : index
    %c0_42 = arith.constant 0 : index
    %53 = vector.load %arg8[%c0_41, %c0_42] : memref<1x32xf32, #tpu.memory_space<vmem>>, vector<1x32xf32>
    tpu.vector_store %arg8[%c0_41, %c0_42], %52 {strides = array<i32>} : memref<1x32xf32, #tpu.memory_space<vmem>>, vector<1x32xf32>,
    return
  }
  func.func @transform_0(%arg0: i32) -> (i32, i32, i32) {
    %c0_i32 = arith.constant 0 : i32
    %c0_i32_0 = arith.constant 0 : i32
    %c0_i32_1 = arith.constant 0 : i32
    return %arg0, %c0_i32, %c0_i32_0 : i32, i32, i32
  }
  func.func @transform_1(%arg0: i32) -> (i32, i32, i32) {
    %c0_i32 = arith.constant 0 : i32
    %c0_i32_0 = arith.constant 0 : i32
    %c0_i32_1 = arith.constant 0 : i32
    %c0_i32_2 = arith.constant 0 : i32
    return %c0_i32, %c0_i32_0, %c0_i32_1 : i32, i32, i32
  }
  func.func @transform_2(%arg0: i32) -> (i32, i32) {
    %c0_i32 = arith.constant 0 : i32
    %c0_i32_0 = arith.constant 0 : i32
    %c0_i32_1 = arith.constant 0 : i32
    return %c0_i32, %c0_i32_0 : i32, i32
  }
  func.func @transform_3(%arg0: i32) -> (i32, i32) {
    %c0_i32 = arith.constant 0 : i32
    %c0_i32_0 = arith.constant 0 : i32
    %c0_i32_1 = arith.constant 0 : i32
    return %c0_i32, %c0_i32_0 : i32, i32
  }
  func.func @transform_4(%arg0: i32) -> (i32, i32) {
    %c0_i32 = arith.constant 0 : i32
    %c0_i32_0 = arith.constant 0 : i32
    %c0_i32_1 = arith.constant 0 : i32
    return %c0_i32, %c0_i32_0 : i32, i32
  }
  func.func @transform_5(%arg0: i32) -> (i32, i32, i32) {
    %c0_i32 = arith.constant 0 : i32
    %c0_i32_0 = arith.constant 0 : i32
    %c0_i32_1 = arith.constant 0 : i32
    return %arg0, %c0_i32, %c0_i32_0 : i32, i32, i32
  }
  func.func @transform_6(%arg0: i32) -> (i32, i32) {
    %c0_i32 = arith.constant 0 : i32
    %c0_i32_0 = arith.constant 0 : i32
    %c0_i32_1 = arith.constant 0 : i32
    return %c0_i32, %c0_i32_0 : i32, i32
  }
  func.func @transform_7(%arg0: i32) -> (i32, i32) {
    %c0_i32 = arith.constant 0 : i32
    %c0_i32_0 = arith.constant 0 : i32
    %c0_i32_1 = arith.constant 0 : i32
    return %c0_i32, %c0_i32_0 : i32, i32
  }
}

module attributes {stable_mosaic.version = 11 : i64} {
  func.func @_conv_reparam_kernel(%arg0: i32, %arg1: memref<1x16x32xbf16, #tpu.memory_space<vmem>>, %arg2: memref<3x32x32xbf16, #tpu.memory_space<vmem>>, %arg3: memref<1x32xf32, #tpu.memory_space<vmem>>, %arg4: memref<1x32xf32, #tpu.memory_space<vmem>>, %arg5: memref<1x32xf32, #tpu.memory_space<vmem>>, %arg6: memref<1x16x16xf32, #tpu.memory_space<vmem>>, %arg7: memref<1x16x16xf32, #tpu.memory_space<vmem>>, %arg8: memref<1x1xf32, #tpu.memory_space<vmem>>, %arg9: memref<24x32xf32, #tpu.memory_space<vmem>>) attributes {dimension_semantics = [#tpu.dimension_semantics<arbitrary>], iteration_bounds = array<i64: 2>, scalar_prefetch = 0 : i64, scratch_operands = 1 : i64, tpu.core_type = #tpu.core_type<tc>, window_params = [{transform_indices = @transform_0, window_bounds = array<i64: 1, 16, 32>}, {pipeline_mode = #tpu.pipeline_mode<synchronous>, transform_indices = @transform_1, window_bounds = array<i64: 3, 32, 32>}, {pipeline_mode = #tpu.pipeline_mode<synchronous>, transform_indices = @transform_2, window_bounds = array<i64: 1, 32>}, {pipeline_mode = #tpu.pipeline_mode<synchronous>, transform_indices = @transform_3, window_bounds = array<i64: 1, 32>}, {pipeline_mode = #tpu.pipeline_mode<synchronous>, transform_indices = @transform_4, window_bounds = array<i64: 1, 32>}, {transform_indices = @transform_5, window_bounds = array<i64: 1, 16, 16>}, {transform_indices = @transform_6, window_bounds = array<i64: 1, 16, 16>}, {pipeline_mode = #tpu.pipeline_mode<synchronous>, transform_indices = @transform_7, window_bounds = array<i64: 1, 1>}]} {
    %c0_i32 = arith.constant 0 : i32
    %0 = arith.cmpi eq, %arg0, %c0_i32 : i32
    %1 = arith.extui %0 : i1 to i32
    %c0_i32_0 = arith.constant 0 : i32
    %2 = arith.cmpi ne, %1, %c0_i32_0 : i32
    scf.if %2 {
      %cst_43 = arith.constant 0.000000e+00 : f32
      %59 = vector.broadcast %cst_43 : f32 to vector<1x1xf32>
      %c0_44 = arith.constant 0 : index
      %c0_45 = arith.constant 0 : index
      %60 = vector.load %arg8[%c0_44, %c0_45] : memref<1x1xf32, #tpu.memory_space<vmem>>, vector<1x1xf32>
      tpu.vector_store %arg8[%c0_44, %c0_45], %59 {strides = array<i32>} : memref<1x1xf32, #tpu.memory_space<vmem>>, vector<1x1xf32>,
    } else {
    }
    %cst = arith.constant 0.000000e+00 : f32
    %3 = vector.broadcast %cst : f32 to vector<24x32xf32>
    %c0 = arith.constant 0 : index
    %c0_1 = arith.constant 0 : index
    %4 = vector.load %arg9[%c0, %c0_1] : memref<24x32xf32, #tpu.memory_space<vmem>>, vector<24x32xf32>
    tpu.vector_store %arg9[%c0, %c0_1], %3 {strides = array<i32>} : memref<24x32xf32, #tpu.memory_space<vmem>>, vector<24x32xf32>,
    %c0_2 = arith.constant 0 : index
    %c0_3 = arith.constant 0 : index
    %c0_4 = arith.constant 0 : index
    %5 = vector.load %arg1[%c0_2, %c0_3, %c0_4] : memref<1x16x32xbf16, #tpu.memory_space<vmem>>, vector<1x16x32xbf16>
    %6 = vector.shape_cast %5 : vector<1x16x32xbf16> to vector<16x32xbf16>
    %7 = arith.extf %6 : vector<16x32xbf16> to vector<16x32xf32>
    %c0_5 = arith.constant 0 : index
    %c0_6 = arith.constant 0 : index
    %8 = vector.load %arg4[%c0_5, %c0_6] : memref<1x32xf32, #tpu.memory_space<vmem>>, vector<1x32xf32>
    %9 = vector.broadcast %8 : vector<1x32xf32> to vector<16x32xf32>
    %10 = arith.mulf %7, %9 : vector<16x32xf32>
    %c0_7 = arith.constant 0 : index
    %c0_8 = arith.constant 0 : index
    %11 = vector.load %arg5[%c0_7, %c0_8] : memref<1x32xf32, #tpu.memory_space<vmem>>, vector<1x32xf32>
    %12 = vector.broadcast %11 : vector<1x32xf32> to vector<16x32xf32>
    %13 = arith.addf %10, %12 : vector<16x32xf32>
    %c1 = arith.constant 1 : index
    %c0_9 = arith.constant 0 : index
    %14 = vector.load %arg9[%c1, %c0_9] : memref<24x32xf32, #tpu.memory_space<vmem>>, vector<16x32xf32>
    tpu.vector_store %arg9[%c1, %c0_9], %13 {strides = array<i32>} : memref<24x32xf32, #tpu.memory_space<vmem>>, vector<16x32xf32>,
    %cst_10 = arith.constant 0.000000e+00 : f32
    %15 = vector.broadcast %cst_10 : f32 to vector<16x32xf32>
    %c0_11 = arith.constant 0 : index
    %c0_12 = arith.constant 0 : index
    %16 = vector.load %arg9[%c0_11, %c0_12] : memref<24x32xf32, #tpu.memory_space<vmem>>, vector<16x32xf32>
    %17 = arith.truncf %16 : vector<16x32xf32> to vector<16x32xbf16>
    %c0_13 = arith.constant 0 : index
    %c0_14 = arith.constant 0 : index
    %c0_15 = arith.constant 0 : index
    %18 = vector.load %arg2[%c0_13, %c0_14, %c0_15] : memref<3x32x32xbf16, #tpu.memory_space<vmem>>, vector<1x32x32xbf16>
    %19 = vector.shape_cast %18 : vector<1x32x32xbf16> to vector<32x32xbf16>
    %cst_16 = arith.constant dense<0.000000e+00> : vector<16x32xf32>
    %20 = tpu.matmul %17, %19, %cst_16 {dimension_numbers = #tpu.dot_dimension_numbers<[1], [0], [0], [1], [0, 0, 1, 1], [], []>} : vector<16x32xbf16>, vector<32x32xbf16>, vector<16x32xf32> -> vector<16x32xf32>
    %21 = arith.addf %15, %20 : vector<16x32xf32>
    %c1_17 = arith.constant 1 : index
    %c0_18 = arith.constant 0 : index
    %22 = vector.load %arg9[%c1_17, %c0_18] : memref<24x32xf32, #tpu.memory_space<vmem>>, vector<16x32xf32>
    %23 = arith.truncf %22 : vector<16x32xf32> to vector<16x32xbf16>
    %c1_19 = arith.constant 1 : index
    %c0_20 = arith.constant 0 : index
    %c0_21 = arith.constant 0 : index
    %24 = vector.load %arg2[%c1_19, %c0_20, %c0_21] : memref<3x32x32xbf16, #tpu.memory_space<vmem>>, vector<1x32x32xbf16>
    %25 = vector.shape_cast %24 : vector<1x32x32xbf16> to vector<32x32xbf16>
    %cst_22 = arith.constant dense<0.000000e+00> : vector<16x32xf32>
    %26 = tpu.matmul %23, %25, %cst_22 {dimension_numbers = #tpu.dot_dimension_numbers<[1], [0], [0], [1], [0, 0, 1, 1], [], []>} : vector<16x32xbf16>, vector<32x32xbf16>, vector<16x32xf32> -> vector<16x32xf32>
    %27 = arith.addf %21, %26 : vector<16x32xf32>
    %c2 = arith.constant 2 : index
    %c0_23 = arith.constant 0 : index
    %28 = vector.load %arg9[%c2, %c0_23] : memref<24x32xf32, #tpu.memory_space<vmem>>, vector<16x32xf32>
    %29 = arith.truncf %28 : vector<16x32xf32> to vector<16x32xbf16>
    %c2_24 = arith.constant 2 : index
    %c0_25 = arith.constant 0 : index
    %c0_26 = arith.constant 0 : index
    %30 = vector.load %arg2[%c2_24, %c0_25, %c0_26] : memref<3x32x32xbf16, #tpu.memory_space<vmem>>, vector<1x32x32xbf16>
    %31 = vector.shape_cast %30 : vector<1x32x32xbf16> to vector<32x32xbf16>
    %cst_27 = arith.constant dense<0.000000e+00> : vector<16x32xf32>
    %32 = tpu.matmul %29, %31, %cst_27 {dimension_numbers = #tpu.dot_dimension_numbers<[1], [0], [0], [1], [0, 0, 1, 1], [], []>} : vector<16x32xbf16>, vector<32x32xbf16>, vector<16x32xf32> -> vector<16x32xf32>
    %33 = arith.addf %27, %32 : vector<16x32xf32>
    %c0_28 = arith.constant 0 : index
    %c0_29 = arith.constant 0 : index
    %34 = vector.load %arg3[%c0_28, %c0_29] : memref<1x32xf32, #tpu.memory_space<vmem>>, vector<1x32xf32>
    %35 = vector.broadcast %34 : vector<1x32xf32> to vector<16x32xf32>
    %36 = arith.addf %33, %35 : vector<16x32xf32>
    %37 = vector.extract_strided_slice %36 {offsets = [0, 0], sizes = [16, 16], strides = [1, 1]} : vector<16x32xf32> to vector<16x16xf32>
    %38 = vector.extract_strided_slice %36 {offsets = [0, 16], sizes = [16, 16], strides = [1, 1]} : vector<16x32xf32> to vector<16x16xf32>
    %39 = math.exp %38 : vector<16x16xf32>
    %c0_30 = arith.constant 0 : index
    %c0_31 = arith.constant 0 : index
    %c0_32 = arith.constant 0 : index
    %40 = vector.load %arg6[%c0_30, %c0_31, %c0_32] : memref<1x16x16xf32, #tpu.memory_space<vmem>>, vector<1x16x16xf32>
    %41 = vector.shape_cast %40 : vector<1x16x16xf32> to vector<16x16xf32>
    %42 = arith.mulf %41, %39 : vector<16x16xf32>
    %43 = arith.addf %42, %37 : vector<16x16xf32>
    %c0_33 = arith.constant 0 : index
    %c0_34 = arith.constant 0 : index
    %c0_35 = arith.constant 0 : index
    %44 = vector.load %arg7[%c0_33, %c0_34, %c0_35] : memref<1x16x16xf32, #tpu.memory_space<vmem>>, vector<1x16x16xf32>
    %45 = vector.shape_cast %44 : vector<1x16x16xf32> to vector<16x16xf32>
    %46 = vector.shape_cast %43 : vector<16x16xf32> to vector<1x16x16xf32>
    tpu.vector_store %arg7[%c0_33, %c0_34, %c0_35], %46 {strides = array<i32>} : memref<1x16x16xf32, #tpu.memory_space<vmem>>, vector<1x16x16xf32>,
    %47 = arith.mulf %37, %37 : vector<16x16xf32>
    %48 = arith.addf %47, %39 : vector<16x16xf32>
    %49 = arith.subf %48, %38 : vector<16x16xf32>
    %cst_36 = arith.constant 1.000000e+00 : f32
    %50 = vector.broadcast %cst_36 : f32 to vector<16x16xf32>
    %51 = arith.subf %49, %50 : vector<16x16xf32>
    %cst_37 = arith.constant dense<0.000000e+00> : vector<16xf32>
    %52 = vector.multi_reduction <add>, %51, %cst_37 [1] : vector<16x16xf32> to vector<16xf32>
    %53 = vector.shape_cast %52 : vector<16xf32> to vector<16x1xf32>
    %c0_38 = arith.constant 0 : index
    %c0_39 = arith.constant 0 : index
    %54 = vector.load %arg8[%c0_38, %c0_39] : memref<1x1xf32, #tpu.memory_space<vmem>>, vector<1x1xf32>
    %cst_40 = arith.constant dense<0.000000e+00> : vector<1xf32>
    %55 = vector.multi_reduction <add>, %53, %cst_40 [0] : vector<16x1xf32> to vector<1xf32>
    %56 = vector.shape_cast %55 : vector<1xf32> to vector<1x1xf32>
    %57 = arith.addf %54, %56 : vector<1x1xf32>
    %c0_41 = arith.constant 0 : index
    %c0_42 = arith.constant 0 : index
    %58 = vector.load %arg8[%c0_41, %c0_42] : memref<1x1xf32, #tpu.memory_space<vmem>>, vector<1x1xf32>
    tpu.vector_store %arg8[%c0_41, %c0_42], %57 {strides = array<i32>} : memref<1x1xf32, #tpu.memory_space<vmem>>, vector<1x1xf32>,
    return
  }
  func.func @transform_0(%arg0: i32) -> (i32, i32, i32) {
    %c0_i32 = arith.constant 0 : i32
    %c0_i32_0 = arith.constant 0 : i32
    %c0_i32_1 = arith.constant 0 : i32
    return %arg0, %c0_i32, %c0_i32_0 : i32, i32, i32
  }
  func.func @transform_1(%arg0: i32) -> (i32, i32, i32) {
    %c0_i32 = arith.constant 0 : i32
    %c0_i32_0 = arith.constant 0 : i32
    %c0_i32_1 = arith.constant 0 : i32
    %c0_i32_2 = arith.constant 0 : i32
    return %c0_i32, %c0_i32_0, %c0_i32_1 : i32, i32, i32
  }
  func.func @transform_2(%arg0: i32) -> (i32, i32) {
    %c0_i32 = arith.constant 0 : i32
    %c0_i32_0 = arith.constant 0 : i32
    %c0_i32_1 = arith.constant 0 : i32
    return %c0_i32, %c0_i32_0 : i32, i32
  }
  func.func @transform_3(%arg0: i32) -> (i32, i32) {
    %c0_i32 = arith.constant 0 : i32
    %c0_i32_0 = arith.constant 0 : i32
    %c0_i32_1 = arith.constant 0 : i32
    return %c0_i32, %c0_i32_0 : i32, i32
  }
  func.func @transform_4(%arg0: i32) -> (i32, i32) {
    %c0_i32 = arith.constant 0 : i32
    %c0_i32_0 = arith.constant 0 : i32
    %c0_i32_1 = arith.constant 0 : i32
    return %c0_i32, %c0_i32_0 : i32, i32
  }
  func.func @transform_5(%arg0: i32) -> (i32, i32, i32) {
    %c0_i32 = arith.constant 0 : i32
    %c0_i32_0 = arith.constant 0 : i32
    %c0_i32_1 = arith.constant 0 : i32
    return %arg0, %c0_i32, %c0_i32_0 : i32, i32, i32
  }
  func.func @transform_6(%arg0: i32) -> (i32, i32, i32) {
    %c0_i32 = arith.constant 0 : i32
    %c0_i32_0 = arith.constant 0 : i32
    %c0_i32_1 = arith.constant 0 : i32
    return %arg0, %c0_i32, %c0_i32_0 : i32, i32, i32
  }
  func.func @transform_7(%arg0: i32) -> (i32, i32) {
    %c0_i32 = arith.constant 0 : i32
    %c0_i32_0 = arith.constant 0 : i32
    %c0_i32_1 = arith.constant 0 : i32
    return %c0_i32, %c0_i32_0 : i32, i32
  }
}

</mosaic_0001>

<llo_original>
// kernel: _lambda_.4
$region0: #{_lambda_.4}
  #allocation0 [shape = 'u32[]', space=smem, size = 0x4, offset = 0x4, fixed_abs, tag = 'smem constant byte address 0x4 - core index']
  #allocation1 [shape = 'u32[144,128]{1,0:T(1,128)}', space=vmem, size = 0x12000, scoped, tag = 'internal scratch']
  #allocation2 [shape = 'f32[40,32]{1,0:T(8,128)}', space=vmem, size = 0x5000, scoped, tag = 'scratch operand']
  %s0 = inlined_call_operand.vmem [shape: bf16[2,32,32], index: 0, kind: input, shape index: {}]
  %s1 = inlined_call_operand.vmem [shape: bf16[3,32,32], index: 1, kind: input, shape index: {}]
  %s2 = inlined_call_operand.vmem [shape: f32[1,32], index: 2, kind: input, shape index: {}]
  %s3 = inlined_call_operand.vmem [shape: f32[1,32], index: 3, kind: input, shape index: {}]
  %s4 = inlined_call_operand.vmem [shape: f32[1,32], index: 4, kind: input, shape index: {}]
  %s5 = inlined_call_operand.vmem [shape: bf16[2,16,32], index: 5, kind: output, shape index: {0}]
  %s6 = inlined_call_operand.vmem [shape: f32[1,32], index: 6, kind: output, shape index: {1}]
  %s7 = inlined_call_operand.vmem [shape: f32[1,32], index: 7, kind: output, shape index: {2}]
  %8 = xla_tuple %s5, %s6, %s7
  %s9 = sld [smem:[#allocation0]]
  $region73: #{_lambda_.4} parent=0
    _
  %s11 = ssub.s32 1, %s9
  %s12 = scalar_select 0, %s11, %s9
  loop: start=0, step=1, limit=4
  $region2: #{_lambda_.4} parent=0 // loop_pre_header
    _
  $region3: #{_lambda_.4} parent=0 // loop_header
    %s14 = sphi 0, %s18
    %p15 = scmp.ge.s32.totalorder %s14, 4
    %s24 = sphi 0, %s26
    %s27 = sphi 0, %s24
    %s28 = sphi 0, %s27
    %s44 = sphi 0, %s28
    %s48 = sphi 0, %s48
    %s50 = sphi 0, %s48
    %s51 = sphi 0, %s50
    %s65 = sphi 0, %s51
    %s69 = sphi 0, %s69
    %s71 = sphi 0, %s69
    %s72 = sphi 0, %s71
    %s86 = sphi 0, %s72
    %s90 = sphi 0, %s90
    %s92 = sphi 0, %s90
    %s93 = sphi 0, %s92
    %s107 = sphi 0, %s93
    %s111 = sphi 0, %s111
    %s113 = sphi 0, %s111
    %s114 = sphi 0, %s113
    %s128 = sphi 0, %s114
    %s134 = sphi 0, %s136
    %s137 = sphi 0, %s134
    %s138 = sphi 0, %s137
    %s154 = sphi 0, %s138
    %s158 = sphi 0, %s158
    %s160 = sphi 0, %s158
    %s161 = sphi 0, %s160
    %s175 = sphi 0, %s161
    %s179 = sphi 0, %s179
    %s181 = sphi 0, %s179
    %s182 = sphi 0, %s181
    %s196 = sphi 0, %s182
  $region4: #{_lambda_.4} parent=0 // loop_header_branch
    %17 = sbr.rel (%p15) target = $region8
  $region5: #{_lambda_.4} parent=0 // loop_body
    %s19 = ssub.s32 %s14, 1
    %s20 = ssub.s32 %s14, 2
    %s21 = sadd.s32 %s14, 1
    %s22 = ssub.s32 %s14, %s21
    %p23 = scmp.eq.s32.totalorder %s22, 0
    %s25 = sadd.s32 %s24, 1
    %s26 = scalar_select %p23, %s24, %s25
    %p29 = pneg %p23
    %p30 = scmp.eq.s32.totalorder %s14, 1
    %p31 = por %p29, %p30
    %p32 = scmp.ne.s32.totalorder %s24, %s27
    %p33 = scmp.eq.s32.totalorder %s14, 0
    %p34 = por %p32, %p33
    %p35 = scmp.ne.s32.totalorder %s24, %s27
    %p36 = scmp.eq.s32.totalorder %s19, 1
    %p37 = por %p35, %p36
    %p38 = scmp.ne.s32.totalorder %s27, %s28
    %p39 = scmp.eq.s32.totalorder %s19, 0
    %p40 = por %p38, %p39
    %p41 = scmp.ne.s32.totalorder %s27, %s28
    %p42 = scmp.eq.s32.totalorder %s20, 1
    %p43 = por %p41, %p42
    %p45 = scmp.ne.s32.totalorder %s28, %s44
    %p46 = scmp.eq.s32.totalorder %s20, 0
    %p47 = por %p45, %p46
    %s49 = sadd.s32 %s48, 1
    %p52 = scmp.eq.s32.totalorder %s14, 1
    %p53 = scmp.ne.s32.totalorder %s48, %s50
    %p54 = scmp.eq.s32.totalorder %s14, 0
    %p55 = por %p53, %p54
    %p56 = scmp.ne.s32.totalorder %s48, %s50
    %p57 = scmp.eq.s32.totalorder %s19, 1
    %p58 = por %p56, %p57
    %p59 = scmp.ne.s32.totalorder %s50, %s51
    %p60 = scmp.eq.s32.totalorder %s19, 0
    %p61 = por %p59, %p60
    %p62 = scmp.ne.s32.totalorder %s50, %s51
    %p63 = scmp.eq.s32.totalorder %s20, 1
    %p64 = por %p62, %p63
    %p66 = scmp.ne.s32.totalorder %s51, %s65
    %p67 = scmp.eq.s32.totalorder %s20, 0
    %p68 = por %p66, %p67
    %s70 = sadd.s32 %s69, 1
    %p73 = scmp.eq.s32.totalorder %s14, 1
    %p74 = scmp.ne.s32.totalorder %s69, %s71
    %p75 = scmp.eq.s32.totalorder %s14, 0
    %p76 = por %p74, %p75
    %p77 = scmp.ne.s32.totalorder %s69, %s71
    %p78 = scmp.eq.s32.totalorder %s19, 1
    %p79 = por %p77, %p78
    %p80 = scmp.ne.s32.totalorder %s71, %s72
    %p81 = scmp.eq.s32.totalorder %s19, 0
    %p82 = por %p80, %p81
    %p83 = scmp.ne.s32.totalorder %s71, %s72
    %p84 = scmp.eq.s32.totalorder %s20, 1
    %p85 = por %p83, %p84
    %p87 = scmp.ne.s32.totalorder %s72, %s86
    %p88 = scmp.eq.s32.totalorder %s20, 0
    %p89 = por %p87, %p88
    %s91 = sadd.s32 %s90, 1
    %p94 = scmp.eq.s32.totalorder %s14, 1
    %p95 = scmp.ne.s32.totalorder %s90, %s92
    %p96 = scmp.eq.s32.totalorder %s14, 0
    %p97 = por %p95, %p96
    %p98 = scmp.ne.s32.totalorder %s90, %s92
    %p99 = scmp.eq.s32.totalorder %s19, 1
    %p100 = por %p98, %p99
    %p101 = scmp.ne.s32.totalorder %s92, %s93
    %p102 = scmp.eq.s32.totalorder %s19, 0
    %p103 = por %p101, %p102
    %p104 = scmp.ne.s32.totalorder %s92, %s93
    %p105 = scmp.eq.s32.totalorder %s20, 1
    %p106 = por %p104, %p105
    %p108 = scmp.ne.s32.totalorder %s93, %s107
    %p109 = scmp.eq.s32.totalorder %s20, 0
    %p110 = por %p108, %p109
    %s112 = sadd.s32 %s111, 1
    %p115 = scmp.eq.s32.totalorder %s14, 1
    %p116 = scmp.ne.s32.totalorder %s111, %s113
    %p117 = scmp.eq.s32.totalorder %s14, 0
    %p118 = por %p116, %p117
    %p119 = scmp.ne.s32.totalorder %s111, %s113
    %p120 = scmp.eq.s32.totalorder %s19, 1
    %p121 = por %p119, %p120
    %p122 = scmp.ne.s32.totalorder %s113, %s114
    %p123 = scmp.eq.s32.totalorder %s19, 0
    %p124 = por %p122, %p123
    %p125 = scmp.ne.s32.totalorder %s113, %s114
    %p126 = scmp.eq.s32.totalorder %s20, 1
    %p127 = por %p125, %p126
    %p129 = scmp.ne.s32.totalorder %s114, %s128
    %p130 = scmp.eq.s32.totalorder %s20, 0
    %p131 = por %p129, %p130
    %s132 = ssub.s32 %s14, %s21
    %p133 = scmp.eq.s32.totalorder %s132, 0
    %s135 = sadd.s32 %s134, 1
    %s136 = scalar_select %p133, %s134, %s135
    %p139 = pneg %p133
    %p140 = scmp.eq.s32.totalorder %s14, 1
    %p141 = por %p139, %p140
    %p142 = scmp.ne.s32.totalorder %s134, %s137
    %p143 = scmp.eq.s32.totalorder %s14, 0
    %p144 = por %p142, %p143
    %p145 = scmp.ne.s32.totalorder %s134, %s137
    %p146 = scmp.eq.s32.totalorder %s19, 1
    %p147 = por %p145, %p146
    %p148 = scmp.ne.s32.totalorder %s137, %s138
    %p149 = scmp.eq.s32.totalorder %s19, 0
    %p150 = por %p148, %p149
    %p151 = scmp.ne.s32.totalorder %s137, %s138
    %p152 = scmp.eq.s32.totalorder %s20, 1
    %p153 = por %p151, %p152
    %p155 = scmp.ne.s32.totalorder %s138, %s154
    %p156 = scmp.eq.s32.totalorder %s20, 0
    %p157 = por %p155, %p156
    %s159 = sadd.s32 %s158, 1
    %p162 = scmp.eq.s32.totalorder %s14, 1
    %p163 = scmp.ne.s32.totalorder %s158, %s160
    %p164 = scmp.eq.s32.totalorder %s14, 0
    %p165 = por %p163, %p164
    %p166 = scmp.ne.s32.totalorder %s158, %s160
    %p167 = scmp.eq.s32.totalorder %s19, 1
    %p168 = por %p166, %p167
    %p169 = scmp.ne.s32.totalorder %s160, %s161
    %p170 = scmp.eq.s32.totalorder %s19, 0
    %p171 = por %p169, %p170
    %p172 = scmp.ne.s32.totalorder %s160, %s161
    %p173 = scmp.eq.s32.totalorder %s20, 1
    %p174 = por %p172, %p173
    %p176 = scmp.ne.s32.totalorder %s161, %s175
    %p177 = scmp.eq.s32.totalorder %s20, 0
    %p178 = por %p176, %p177
    %s180 = sadd.s32 %s179, 1
    %p183 = scmp.eq.s32.totalorder %s14, 1
    %p184 = scmp.ne.s32.totalorder %s179, %s181
    %p185 = scmp.eq.s32.totalorder %s14, 0
    %p186 = por %p184, %p185
    %p187 = scmp.ne.s32.totalorder %s179, %s181
    %p188 = scmp.eq.s32.totalorder %s19, 1
    %p189 = por %p187, %p188
    %p190 = scmp.ne.s32.totalorder %s181, %s182
    %p191 = scmp.eq.s32.totalorder %s19, 0
    %p192 = por %p190, %p191
    %p193 = scmp.ne.s32.totalorder %s181, %s182
    %p194 = scmp.eq.s32.totalorder %s20, 1
    %p195 = por %p193, %p194
    %p197 = scmp.ne.s32.totalorder %s182, %s196
    %p198 = scmp.eq.s32.totalorder %s20, 0
    %p199 = por %p197, %p198
    %p200 = scmp.le.s32.totalorder 1, %s14
    %p201 = scmp.lt.s32.totalorder %s14, 3
    %p202 = pnand %p200, %p201
    %p203 = pneg %p202
    // Predicated region
    $region9: #{_lambda_.4} parent=5 // pred_check
      _
    $region10: #{_lambda_.4} parent=5 // pred_check_branch
      %205 = sbr.rel (%p202) target = $region12
    $region11: #{_lambda_.4} parent=5 // pred_region
      %s206 = ssub.s32 %s14, 1
      // Predicated region
      $region13: #{_lambda_.4} parent=11 // pred_check
        %p207 = pneg %p61
      $region14: #{_lambda_.4} parent=11 // pred_check_branch
        %209 = sbr.rel (%p207) target = $region16
      $region15: #{_lambda_.4} parent=11 // pred_region
        _
      $region16: #{_lambda_.4} parent=11 // pred_fallthru
        _
      // Predicated region
      $region17: #{_lambda_.4} parent=11 // pred_check
        %p210 = pneg %p82
      $region18: #{_lambda_.4} parent=11 // pred_check_branch
        %212 = sbr.rel (%p210) target = $region20
      $region19: #{_lambda_.4} parent=11 // pred_region
        _
      $region20: #{_lambda_.4} parent=11 // pred_fallthru
        _
      // Predicated region
      $region21: #{_lambda_.4} parent=11 // pred_check
        %p213 = pneg %p103
      $region22: #{_lambda_.4} parent=11 // pred_check_branch
        %215 = sbr.rel (%p213) target = $region24
      $region23: #{_lambda_.4} parent=11 // pred_region
        _
      $region24: #{_lambda_.4} parent=11 // pred_fallthru
        _
      // Predicated region
      $region25: #{_lambda_.4} parent=11 // pred_check
        %p216 = pneg %p124
      $region26: #{_lambda_.4} parent=11 // pred_check_branch
        %218 = sbr.rel (%p216) target = $region28
      $region27: #{_lambda_.4} parent=11 // pred_region
        _
      $region28: #{_lambda_.4} parent=11 // pred_fallthru
        _
    $region12: #{_lambda_.4} parent=5 // pred_fallthru
      _
    %p219 = scmp.lt.s32.totalorder %s14, 2
    // Predicated region
    $region29: #{_lambda_.4} parent=5 // pred_check
      %p220 = pneg %p219
    $region30: #{_lambda_.4} parent=5 // pred_check_branch
      %222 = sbr.rel (%p220) target = $region32
    $region31: #{_lambda_.4} parent=5 // pred_region
      // Predicated region
      $region33: #{_lambda_.4} parent=31 // pred_check
        %p223 = pneg %p34
      $region34: #{_lambda_.4} parent=31 // pred_check_branch
        %225 = sbr.rel (%p223) target = $region36
      $region35: #{_lambda_.4} parent=31 // pred_region
        %p226 = scmp.lt.s32.totalorder %s14, 1
        %s227 = scalar_select %p226, %s14, 1
        %s228 = smul.addr %s227, 4
        %s229 = smul.addr %s228, 4
        %s230 = scalar_lea.vmem %s0, %s229
      $region36: #{_lambda_.4} parent=31 // pred_fallthru
        _
    $region32: #{_lambda_.4} parent=5 // pred_fallthru
      _
    %p231 = scmp.le.s32.totalorder 1, %s14
    %p232 = scmp.lt.s32.totalorder %s14, 3
    %p233 = pnand %p231, %p232
    %p234 = pneg %p233
    // Predicated region
    $region37: #{_lambda_.4} parent=5 // pred_check
      _
    $region38: #{_lambda_.4} parent=5 // pred_check_branch
      %236 = sbr.rel (%p233) target = $region40
    $region39: #{_lambda_.4} parent=5 // pred_region
      %s237 = ssub.s32 %s14, 1
      %p238 = scmp.lt.s32.totalorder %s19, 1
      %s239 = scalar_select %p238, %s19, 1
      %s240 = smul.addr %s239, 4
      %s241 = smul.addr %s240, 4
      %s242 = scalar_lea.vmem %s0, %s241
      %p243 = pneg %p40
      %p244 = pneg %p37
      %p245 = pneg %p61
      %p246 = pneg %p58
      %p247 = pneg %p82
      %p248 = pneg %p79
      %p249 = pneg %p103
      %p250 = pneg %p100
      %p251 = pneg %p124
      %p252 = pneg %p121
      %p253 = pneg %p150
      %p254 = pneg %p147
      %p255 = scmp.lt.s32.totalorder %s19, 1
      %s256 = scalar_select %p255, %s19, 1
      %s257 = smul.addr %s256, 2
      %s258 = smul.addr %s257, 4
      %s259 = scalar_lea.vmem %s5, %s258
      %p260 = pneg %p171
      %p261 = pneg %p168
      %p262 = pneg %p192
      %p263 = pneg %p189
      %p264 = scmp.lt.s32.totalorder %s19, 1
      %s265 = scalar_select %p264, %s19, 1
      %s266 = smul.addr %s265, 4
      %s267 = smul.addr %s266, 4
      %s268 = scalar_lea.vmem %s0, %s267
      %p269 = scmp.lt.s32.totalorder %s19, 1
      %s270 = scalar_select %p269, %s19, 1
      %s271 = smul.addr %s270, 2
      %s272 = smul.addr %s271, 4
      %s273 = scalar_lea.vmem %s5, %s272
      %p275 = scmp.eq.s32.totalorder %s19, 0
      // Predicated region
      $region41: #{_lambda_.4} parent=39 // pred_check
        %p276 = pneg %p275
      $region42: #{_lambda_.4} parent=39 // pred_check_branch
        %278 = sbr.rel (%p276) target = $region44
      $region43: #{_lambda_.4} parent=39 // pred_region
        %vm279 = vcmask 253952
        %280 = vst.msk [vmem:[%s6] sm:$0x1] %vm279, 0.0
        %281 = vst.msk [vmem:[%s7] sm:$0x1] %vm279, 0.0
      $region44: #{_lambda_.4} parent=39 // pred_fallthru
        _
      %vm282 = vcmask 261120
      %283 = vst.msk [vmem:[#allocation2] sm:$0xff] %vm282, 0.0
      %284 = vst.msk [vmem:[#allocation2 + $0x8] sm:$0xff] %vm282, 0.0
      %285 = vst.msk [vmem:[#allocation2 + $0x10] sm:$0xff] %vm282, 0.0
      %286 = vst.msk [vmem:[#allocation2 + $0x18] sm:$0xff] %vm282, 0.0
      %287 = vst.msk [vmem:[#allocation2 + $0x20] sm:$0xff] %vm282, 0.0
      %v288 = vld [vmem:[%s268] sm:$0xf]
      %v289 = vld [vmem:[%s268 + $0x4] sm:$0xf]
      %v290 = vld [vmem:[%s268 + $0x8] sm:$0xf]
      %v291 = vld [vmem:[%s268 + $0xc] sm:$0xf]
      %v292 = vunpack.c.l.bf16 %v288
      %v293 = vunpack.c.l.bf16 %v289
      %v294 = vunpack.c.l.bf16 %v290
      %v295 = vunpack.c.l.bf16 %v291
      %v296 = vld [vmem:[%s3] sm:$0x1]
      %v298 = vlaneseq
      %v299 = vshrl.u32 %v298, 7
      %v300 = vsub.s32 0, %v299
      %v301 = vrot.slane %v296, %v300
      %v303 = vmul.f32 %v292, %v301
      %v304 = vmul.f32 %v293, %v301
      %v305 = vmul.f32 %v294, %v301
      %v306 = vmul.f32 %v295, %v301
      %v307 = vld [vmem:[%s4] sm:$0x1]
      %v309 = vlaneseq
      %v310 = vshrl.u32 %v309, 7
      %v311 = vsub.s32 0, %v310
      %v312 = vrot.slane %v307, %v311
      %v314 = vadd.f32 %v303, %v312
      %v315 = vadd.f32 %v304, %v312
      %v316 = vadd.f32 %v305, %v312
      %v317 = vadd.f32 %v306, %v312
      %318 = vst.msk [vmem:[#allocation2 + $0x2] sm:$0xff] %vm282, %v314
      %319 = vst.msk [vmem:[#allocation2 + $0xa] sm:$0xff] %vm282, %v315
      %320 = vst.msk [vmem:[#allocation2 + $0x12] sm:$0xff] %vm282, %v316
      %321 = vst.msk [vmem:[#allocation2 + $0x1a] sm:$0xff] %vm282, %v317
      %v322 = vld [vmem:[#allocation2] ss:$2 sm:$0xff]
      %s323 = scalar_lea.vmem [#allocation2], 16
      %v324 = vld [vmem:[%s323] ss:$2 sm:$0xff]
      %v325 = vpack.c.bf16 %v324, %v322
      %v326 = vld [vmem:[%s1] sm:$0xf]
      %v327 = vld [vmem:[%s1 + $0x4] sm:$0xf]
      %v328 = vld [vmem:[%s1 + $0x8] sm:$0xf]
      %v329 = vld [vmem:[%s1 + $0xc] sm:$0xf]
      %s330 = scalar_lea.vmem [#allocation2], 2
      %v331 = vld [vmem:[%s330] ss:$2 sm:$0xff]
      %s332 = scalar_lea.vmem [#allocation2], 18
      %v333 = vld [vmem:[%s332] ss:$2 sm:$0xff]
      %v334 = vpack.c.bf16 %v333, %v331
      %s335 = scalar_lea.vmem %s1, 16
      %v336 = vld [vmem:[%s335] sm:$0xf]
      %v337 = vld [vmem:[%s335 + $0x4] sm:$0xf]
      %v338 = vld [vmem:[%s335 + $0x8] sm:$0xf]
      %v339 = vld [vmem:[%s335 + $0xc] sm:$0xf]
      %v344 = vunpack.c.l.b16 %v336
      %v345 = vunpack.c.l.b16 %v337
      %v346 = vunpack.c.l.b16 %v338
      %v347 = vunpack.c.l.b16 %v339
      %v348 = vpack.c.b16 %v345, %v344
      %v349 = vpack.c.b16 %v347, %v346
      %v353 = vsel %vm282, %v334, 0
      %355 = vmatprep.subr.bf16.mxu0 0
      %356 = vmatpush1.bf16.msra.mxu0 %v348
      %357 = vmatprep.subr.bf16.mxu0 0
      %358 = vmatpush1.bf16.msra.mxu0 %v349
      %359 = vmatprep.subr.bf16.mxu0 0
      %360 = vmatpush1.bf16.msra.mxu0 0
      %361 = vmatprep.subr.bf16.mxu0 0
      %362 = vmatpush1.bf16.msra.mxu0 0
      %363 = vmatprep.subr.bf16.mxu0 0
      %364 = vmatpush1.bf16.msra.mxu0 0
      %365 = vmatprep.subr.bf16.mxu0 0
      %366 = vmatpush1.bf16.msra.mxu0 0
      %367 = vmatprep.subr.bf16.mxu0 0
      %368 = vmatpush1.bf16.msra.mxu0 0
      %369 = vmatprep.subr.bf16.mxu0 0
      %370 = vmatpush1.bf16.msra.mxu0 0
      %371 = vmatprep.subr.bf16.mxu0 0
      %372 = vmatpush1.bf16.msra.mxu0 0
      %373 = vmatprep.subr.bf16.mxu0 0
      %374 = vmatpush1.bf16.msra.mxu0 0
      %375 = vmatprep.subr.bf16.mxu0 0
      %376 = vmatpush1.bf16.msra.mxu0 0
      %377 = vmatprep.subr.bf16.mxu0 0
      %378 = vmatpush1.bf16.msra.mxu0 0
      %379 = vmatprep.subr.bf16.mxu0 0
      %380 = vmatpush1.bf16.msra.mxu0 0
      %381 = vmatprep.subr.bf16.mxu0 0
      %382 = vmatpush1.bf16.msra.mxu0 0
      %383 = vmatprep.subr.bf16.mxu0 0
      %384 = vmatpush1.bf16.msra.mxu0 0
      %385 = vmatprep.subr.bf16.mxu0 0
      %386 = vmatpush1.bf16.msra.mxu0 0
      %387 = vmatprep.mubr.bf16.mxu0 0
      %388 = vmatmul.mubr.bf16.gmra.mrb[0].mxu0 %v353
      %v389 = vpop.f32.mrb[0].mxu0
      %v390 = vadd.f32 0.0, %v389
      %v391 = vpop.f32.mrb[0].mxu0
      %v392 = vpop.f32.mrb[0].mxu0
      %v393 = vadd.f32 0.0, %v392
      %v394 = vpop.f32.mrb[0].mxu0
      %395 = vdwg.mxu0
      %v400 = vunpack.c.l.b16 %v326
      %v401 = vunpack.c.l.b16 %v327
      %v402 = vunpack.c.l.b16 %v328
      %v403 = vunpack.c.l.b16 %v329
      %v404 = vpack.c.b16 %v401, %v400
      %v405 = vpack.c.b16 %v403, %v402
      %v409 = vsel %vm282, %v325, 0
      %411 = vmatprep.subr.bf16.mxu0 0
      %412 = vmatpush1.bf16.msra.mxu0 %v404
      %413 = vmatprep.subr.bf16.mxu0 0
      %414 = vmatpush1.bf16.msra.mxu0 %v405
      %415 = vmatprep.subr.bf16.mxu0 0
      %416 = vmatpush1.bf16.msra.mxu0 0
      %417 = vmatprep.subr.bf16.mxu0 0
      %418 = vmatpush1.bf16.msra.mxu0 0
      %419 = vmatprep.subr.bf16.mxu0 0
      %420 = vmatpush1.bf16.msra.mxu0 0
      %421 = vmatprep.subr.bf16.mxu0 0
      %422 = vmatpush1.bf16.msra.mxu0 0
      %423 = vmatprep.subr.bf16.mxu0 0
      %424 = vmatpush1.bf16.msra.mxu0 0
      %425 = vmatprep.subr.bf16.mxu0 0
      %426 = vmatpush1.bf16.msra.mxu0 0
      %427 = vmatprep.subr.bf16.mxu0 0
      %428 = vmatpush1.bf16.msra.mxu0 0
      %429 = vmatprep.subr.bf16.mxu0 0
      %430 = vmatpush1.bf16.msra.mxu0 0
      %431 = vmatprep.subr.bf16.mxu0 0
      %432 = vmatpush1.bf16.msra.mxu0 0
      %433 = vmatprep.subr.bf16.mxu0 0
      %434 = vmatpush1.bf16.msra.mxu0 0
      %435 = vmatprep.subr.bf16.mxu0 0
      %436 = vmatpush1.bf16.msra.mxu0 0
      %437 = vmatprep.subr.bf16.mxu0 0
      %438 = vmatpush1.bf16.msra.mxu0 0
      %439 = vmatprep.subr.bf16.mxu0 0
      %440 = vmatpush1.bf16.msra.mxu0 0
      %441 = vmatprep.subr.bf16.mxu0 0
      %442 = vmatpush1.bf16.msra.mxu0 0
      %443 = vmatprep.mubr.bf16.mxu0 0
      %444 = vmatmul.mubr.bf16.gmra.mrb[0].mxu0 %v409
      %v445 = vpop.f32.mrb[0].mxu0
      %v446 = vadd.f32 %v390, %v445
      %v447 = vpop.f32.mrb[0].mxu0
      %v448 = vpop.f32.mrb[0].mxu0
      %v449 = vadd.f32 %v393, %v448
      %v450 = vpop.f32.mrb[0].mxu0
      %451 = vdwg.mxu0
      %s452 = scalar_lea.vmem [#allocation2], 4
      %v453 = vld [vmem:[%s452] ss:$2 sm:$0xff]
      %s454 = scalar_lea.vmem [#allocation2], 20
      %v455 = vld [vmem:[%s454] ss:$2 sm:$0xff]
      %v456 = vpack.c.bf16 %v455, %v453
      %s457 = scalar_lea.vmem %s1, 32
      %v458 = vld [vmem:[%s457] sm:$0xf]
      %v459 = vld [vmem:[%s457 + $0x4] sm:$0xf]
      %v460 = vld [vmem:[%s457 + $0x8] sm:$0xf]
      %v461 = vld [vmem:[%s457 + $0xc] sm:$0xf]
      %v466 = vunpack.c.l.b16 %v458
      %v467 = vunpack.c.l.b16 %v459
      %v468 = vunpack.c.l.b16 %v460
      %v469 = vunpack.c.l.b16 %v461
      %v470 = vpack.c.b16 %v467, %v466
      %v471 = vpack.c.b16 %v469, %v468
      %v475 = vsel %vm282, %v456, 0
      %477 = vmatprep.subr.bf16.mxu0 0
      %478 = vmatpush1.bf16.msra.mxu0 %v470
      %479 = vmatprep.subr.bf16.mxu0 0
      %480 = vmatpush1.bf16.msra.mxu0 %v471
      %481 = vmatprep.subr.bf16.mxu0 0
      %482 = vmatpush1.bf16.msra.mxu0 0
      %483 = vmatprep.subr.bf16.mxu0 0
      %484 = vmatpush1.bf16.msra.mxu0 0
      %485 = vmatprep.subr.bf16.mxu0 0
      %486 = vmatpush1.bf16.msra.mxu0 0
      %487 = vmatprep.subr.bf16.mxu0 0
      %488 = vmatpush1.bf16.msra.mxu0 0
      %489 = vmatprep.subr.bf16.mxu0 0
      %490 = vmatpush1.bf16.msra.mxu0 0
      %491 = vmatprep.subr.bf16.mxu0 0
      %492 = vmatpush1.bf16.msra.mxu0 0
      %493 = vmatprep.subr.bf16.mxu0 0
      %494 = vmatpush1.bf16.msra.mxu0 0
      %495 = vmatprep.subr.bf16.mxu0 0
      %496 = vmatpush1.bf16.msra.mxu0 0
      %497 = vmatprep.subr.bf16.mxu0 0
      %498 = vmatpush1.bf16.msra.mxu0 0
      %499 = vmatprep.subr.bf16.mxu0 0
      %500 = vmatpush1.bf16.msra.mxu0 0
      %501 = vmatprep.subr.bf16.mxu0 0
      %502 = vmatpush1.bf16.msra.mxu0 0
      %503 = vmatprep.subr.bf16.mxu0 0
      %504 = vmatpush1.bf16.msra.mxu0 0
      %505 = vmatprep.subr.bf16.mxu0 0
      %506 = vmatpush1.bf16.msra.mxu0 0
      %507 = vmatprep.subr.bf16.mxu0 0
      %508 = vmatpush1.bf16.msra.mxu0 0
      %509 = vmatprep.mubr.bf16.mxu0 0
      %510 = vmatmul.mubr.bf16.gmra.mrb[0].mxu0 %v475
      %v511 = vpop.f32.mrb[0].mxu0
      %v512 = vadd.f32 0.0, %v511
      %v513 = vpop.f32.mrb[0].mxu0
      %v514 = vpop.f32.mrb[0].mxu0
      %v515 = vadd.f32 0.0, %v514
      %v516 = vpop.f32.mrb[0].mxu0
      %517 = vdwg.mxu0
      %v518 = vadd.f32 %v446, %v512
      %v519 = vadd.f32 %v449, %v515
      %v520 = vld [vmem:[%s2] sm:$0x1]
      %v522 = vlaneseq
      %v523 = vshrl.u32 %v522, 7
      %v524 = vsub.s32 0, %v523
      %v525 = vrot.slane %v520, %v524
      %v527 = vadd.f32 %v518, %v525
      %v528 = vadd.f32 %v519, %v525
      %v529 = vmax.f32 %v527, 0.0
      %v530 = vmax.f32 %v528, 0.0
      %v531 = vpack.c.bf16 %v530, %v529
      %v533 = vunpack.c.l.b16 %v531
      %v534 = vunpack.c.h.b16 %v531
      %v535 = vpack.c.b16 %v533, %v533
      %v536 = vpack.c.b16 %v534, %v534
      %vm539 = vcmask 257024
      %540 = vst.msk [vmem:[%s273] sm:$0xf] %vm539, %v535
      %541 = vst.msk [vmem:[%s273 + $0x4] sm:$0xf] %vm539, %v536
      %v542 = vld [vmem:[%s6] sm:$0x1]
      %v543 = vsel %vm282, %v529, 0.0
      %v544 = vsel %vm282, %v530, 0.0
      %v545 = vadd.f32 %v543, %v544
      %v546 = vrot.slane %v545, 4
      %v547 = vadd.f32 %v545, %v546
      %v548 = vrot.slane %v547, 2
      %v549 = vadd.f32 %v547, %v548
      %v550 = vrot.slane %v549, 1
      %v551 = vadd.f32 %v549, %v550
      %v552 = vadd.f32 %v542, %v551
      %vm553 = vcmask 253952
      %554 = vst.msk [vmem:[%s6] sm:$0x1] %vm553, %v552
      %v555 = vld [vmem:[%s7] sm:$0x1]
      %v556 = vmul.f32 %v529, %v529
      %v557 = vmul.f32 %v530, %v530
      %v558 = vsel %vm282, %v556, 0.0
      %v559 = vsel %vm282, %v557, 0.0
      %v560 = vadd.f32 %v558, %v559
      %v561 = vrot.slane %v560, 4
      %v562 = vadd.f32 %v560, %v561
      %v563 = vrot.slane %v562, 2
      %v564 = vadd.f32 %v562, %v563
      %v565 = vrot.slane %v564, 1
      %v566 = vadd.f32 %v564, %v565
      %v567 = vadd.f32 %v555, %v566
      %568 = vst.msk [vmem:[%s7] sm:$0x1] %vm553, %v567
      %p569 = scmp.lt.s32.totalorder %s19, 1
      %s570 = scalar_select %p569, %s19, 1
      %s571 = smul.addr %s570, 2
      %s572 = smul.addr %s571, 4
      %s573 = scalar_lea.vmem %s5, %s572
      // Predicated region
      $region45: #{_lambda_.4} parent=39 // pred_check
        %p574 = pneg %p147
      $region46: #{_lambda_.4} parent=39 // pred_check_branch
        %576 = sbr.rel (%p574) target = $region48
      $region47: #{_lambda_.4} parent=39 // pred_region
        _
      $region48: #{_lambda_.4} parent=39 // pred_fallthru
        _
      // Predicated region
      $region49: #{_lambda_.4} parent=39 // pred_check
        %p577 = pneg %p168
      $region50: #{_lambda_.4} parent=39 // pred_check_branch
        %579 = sbr.rel (%p577) target = $region52
      $region51: #{_lambda_.4} parent=39 // pred_region
        _
      $region52: #{_lambda_.4} parent=39 // pred_fallthru
        _
      // Predicated region
      $region53: #{_lambda_.4} parent=39 // pred_check
        %p580 = pneg %p189
      $region54: #{_lambda_.4} parent=39 // pred_check_branch
        %582 = sbr.rel (%p580) target = $region56
      $region55: #{_lambda_.4} parent=39 // pred_region
        _
      $region56: #{_lambda_.4} parent=39 // pred_fallthru
        _
      // Predicated region
      $region57: #{_lambda_.4} parent=39 // pred_check
        %p583 = pneg %p168
      $region58: #{_lambda_.4} parent=39 // pred_check_branch
        %585 = sbr.rel (%p583) target = $region60
      $region59: #{_lambda_.4} parent=39 // pred_region
        _
      $region60: #{_lambda_.4} parent=39 // pred_fallthru
        _
      // Predicated region
      $region61: #{_lambda_.4} parent=39 // pred_check
        %p586 = pneg %p189
      $region62: #{_lambda_.4} parent=39 // pred_check_branch
        %588 = sbr.rel (%p586) target = $region64
      $region63: #{_lambda_.4} parent=39 // pred_region
        _
      $region64: #{_lambda_.4} parent=39 // pred_fallthru
        _
    $region40: #{_lambda_.4} parent=5 // pred_fallthru
      _
    %p589 = scmp.le.s32.totalorder 2, %s14
    // Predicated region
    $region65: #{_lambda_.4} parent=5 // pred_check
      %p590 = pneg %p589
    $region66: #{_lambda_.4} parent=5 // pred_check_branch
      %592 = sbr.rel (%p590) target = $region68
    $region67: #{_lambda_.4} parent=5 // pred_region
      %s593 = ssub.s32 %s14, 2
      // Predicated region
      $region69: #{_lambda_.4} parent=67 // pred_check
        %p594 = pneg %p153
      $region70: #{_lambda_.4} parent=67 // pred_check_branch
        %596 = sbr.rel (%p594) target = $region72
      $region71: #{_lambda_.4} parent=67 // pred_region
        %p597 = scmp.lt.s32.totalorder %s20, 1
        %s598 = scalar_select %p597, %s20, 1
        %s599 = smul.addr %s598, 2
        %s600 = smul.addr %s599, 4
        %s601 = scalar_lea.vmem %s5, %s600
      $region72: #{_lambda_.4} parent=67 // pred_fallthru
        _
    $region68: #{_lambda_.4} parent=5 // pred_fallthru
      _
  $region6: #{_lambda_.4} parent=0 // loop_footer
    %s18 = sadd.s32 1, %s14
  $region7: #{_lambda_.4} parent=0 // loop_footer_branch
    %13 = sbr.rel target = $region3
  $region8: #{_lambda_.4} parent=0 // loop_exit
    _

// kernel: _lambda_.3
$region0: #{_lambda_.3}
  #allocation0 [shape = 'u32[]', space=smem, size = 0x4, offset = 0x4, fixed_abs, tag = 'smem constant byte address 0x4 - core index']
  #allocation1 [shape = 'u32[144,128]{1,0:T(1,128)}', space=vmem, size = 0x12000, scoped, tag = 'internal scratch']
  #allocation2 [shape = 'f32[72,4]{1,0:T(8,128)}', space=vmem, size = 0x9000, scoped, tag = 'scratch operand']
  %s0 = inlined_call_operand.vmem [shape: bf16[2,64,4], index: 0, kind: input, shape index: {}]
  %s1 = inlined_call_operand.vmem [shape: bf16[3,4,32], index: 1, kind: input, shape index: {}]
  %s2 = inlined_call_operand.vmem [shape: f32[1,32], index: 2, kind: input, shape index: {}]
  %s3 = inlined_call_operand.vmem [shape: f32[1,4], index: 3, kind: input, shape index: {}]
  %s4 = inlined_call_operand.vmem [shape: f32[1,4], index: 4, kind: input, shape index: {}]
  %s5 = inlined_call_operand.vmem [shape: bf16[2,32,32], index: 5, kind: output, shape index: {0}]
  %s6 = inlined_call_operand.vmem [shape: f32[1,32], index: 6, kind: output, shape index: {1}]
  %s7 = inlined_call_operand.vmem [shape: f32[1,32], index: 7, kind: output, shape index: {2}]
  %8 = xla_tuple %s5, %s6, %s7
  %s9 = sld [smem:[#allocation0]]
  $region73: #{_lambda_.3} parent=0
    _
  %s11 = ssub.s32 1, %s9
  %s12 = scalar_select 0, %s11, %s9
  loop: start=0, step=1, limit=4
  $region2: #{_lambda_.3} parent=0 // loop_pre_header
    _
  $region3: #{_lambda_.3} parent=0 // loop_header
    %s14 = sphi 0, %s18
    %p15 = scmp.ge.s32.totalorder %s14, 4
    %s24 = sphi 0, %s26
    %s27 = sphi 0, %s24
    %s28 = sphi 0, %s27
    %s44 = sphi 0, %s28
    %s48 = sphi 0, %s48
    %s50 = sphi 0, %s48
    %s51 = sphi 0, %s50
    %s65 = sphi 0, %s51
    %s69 = sphi 0, %s69
    %s71 = sphi 0, %s69
    %s72 = sphi 0, %s71
    %s86 = sphi 0, %s72
    %s90 = sphi 0, %s90
    %s92 = sphi 0, %s90
    %s93 = sphi 0, %s92
    %s107 = sphi 0, %s93
    %s111 = sphi 0, %s111
    %s113 = sphi 0, %s111
    %s114 = sphi 0, %s113
    %s128 = sphi 0, %s114
    %s134 = sphi 0, %s136
    %s137 = sphi 0, %s134
    %s138 = sphi 0, %s137
    %s154 = sphi 0, %s138
    %s158 = sphi 0, %s158
    %s160 = sphi 0, %s158
    %s161 = sphi 0, %s160
    %s175 = sphi 0, %s161
    %s179 = sphi 0, %s179
    %s181 = sphi 0, %s179
    %s182 = sphi 0, %s181
    %s196 = sphi 0, %s182
  $region4: #{_lambda_.3} parent=0 // loop_header_branch
    %17 = sbr.rel (%p15) target = $region8
  $region5: #{_lambda_.3} parent=0 // loop_body
    %s19 = ssub.s32 %s14, 1
    %s20 = ssub.s32 %s14, 2
    %s21 = sadd.s32 %s14, 1
    %s22 = ssub.s32 %s14, %s21
    %p23 = scmp.eq.s32.totalorder %s22, 0
    %s25 = sadd.s32 %s24, 1
    %s26 = scalar_select %p23, %s24, %s25
    %p29 = pneg %p23
    %p30 = scmp.eq.s32.totalorder %s14, 1
    %p31 = por %p29, %p30
    %p32 = scmp.ne.s32.totalorder %s24, %s27
    %p33 = scmp.eq.s32.totalorder %s14, 0
    %p34 = por %p32, %p33
    %p35 = scmp.ne.s32.totalorder %s24, %s27
    %p36 = scmp.eq.s32.totalorder %s19, 1
    %p37 = por %p35, %p36
    %p38 = scmp.ne.s32.totalorder %s27, %s28
    %p39 = scmp.eq.s32.totalorder %s19, 0
    %p40 = por %p38, %p39
    %p41 = scmp.ne.s32.totalorder %s27, %s28
    %p42 = scmp.eq.s32.totalorder %s20, 1
    %p43 = por %p41, %p42
    %p45 = scmp.ne.s32.totalorder %s28, %s44
    %p46 = scmp.eq.s32.totalorder %s20, 0
    %p47 = por %p45, %p46
    %s49 = sadd.s32 %s48, 1
    %p52 = scmp.eq.s32.totalorder %s14, 1
    %p53 = scmp.ne.s32.totalorder %s48, %s50
    %p54 = scmp.eq.s32.totalorder %s14, 0
    %p55 = por %p53, %p54
    %p56 = scmp.ne.s32.totalorder %s48, %s50
    %p57 = scmp.eq.s32.totalorder %s19, 1
    %p58 = por %p56, %p57
    %p59 = scmp.ne.s32.totalorder %s50, %s51
    %p60 = scmp.eq.s32.totalorder %s19, 0
    %p61 = por %p59, %p60
    %p62 = scmp.ne.s32.totalorder %s50, %s51
    %p63 = scmp.eq.s32.totalorder %s20, 1
    %p64 = por %p62, %p63
    %p66 = scmp.ne.s32.totalorder %s51, %s65
    %p67 = scmp.eq.s32.totalorder %s20, 0
    %p68 = por %p66, %p67
    %s70 = sadd.s32 %s69, 1
    %p73 = scmp.eq.s32.totalorder %s14, 1
    %p74 = scmp.ne.s32.totalorder %s69, %s71
    %p75 = scmp.eq.s32.totalorder %s14, 0
    %p76 = por %p74, %p75
    %p77 = scmp.ne.s32.totalorder %s69, %s71
    %p78 = scmp.eq.s32.totalorder %s19, 1
    %p79 = por %p77, %p78
    %p80 = scmp.ne.s32.totalorder %s71, %s72
    %p81 = scmp.eq.s32.totalorder %s19, 0
    %p82 = por %p80, %p81
    %p83 = scmp.ne.s32.totalorder %s71, %s72
    %p84 = scmp.eq.s32.totalorder %s20, 1
    %p85 = por %p83, %p84
    %p87 = scmp.ne.s32.totalorder %s72, %s86
    %p88 = scmp.eq.s32.totalorder %s20, 0
    %p89 = por %p87, %p88
    %s91 = sadd.s32 %s90, 1
    %p94 = scmp.eq.s32.totalorder %s14, 1
    %p95 = scmp.ne.s32.totalorder %s90, %s92
    %p96 = scmp.eq.s32.totalorder %s14, 0
    %p97 = por %p95, %p96
    %p98 = scmp.ne.s32.totalorder %s90, %s92
    %p99 = scmp.eq.s32.totalorder %s19, 1
    %p100 = por %p98, %p99
    %p101 = scmp.ne.s32.totalorder %s92, %s93
    %p102 = scmp.eq.s32.totalorder %s19, 0
    %p103 = por %p101, %p102
    %p104 = scmp.ne.s32.totalorder %s92, %s93
    %p105 = scmp.eq.s32.totalorder %s20, 1
    %p106 = por %p104, %p105
    %p108 = scmp.ne.s32.totalorder %s93, %s107
    %p109 = scmp.eq.s32.totalorder %s20, 0
    %p110 = por %p108, %p109
    %s112 = sadd.s32 %s111, 1
    %p115 = scmp.eq.s32.totalorder %s14, 1
    %p116 = scmp.ne.s32.totalorder %s111, %s113
    %p117 = scmp.eq.s32.totalorder %s14, 0
    %p118 = por %p116, %p117
    %p119 = scmp.ne.s32.totalorder %s111, %s113
    %p120 = scmp.eq.s32.totalorder %s19, 1
    %p121 = por %p119, %p120
    %p122 = scmp.ne.s32.totalorder %s113, %s114
    %p123 = scmp.eq.s32.totalorder %s19, 0
    %p124 = por %p122, %p123
    %p125 = scmp.ne.s32.totalorder %s113, %s114
    %p126 = scmp.eq.s32.totalorder %s20, 1
    %p127 = por %p125, %p126
    %p129 = scmp.ne.s32.totalorder %s114, %s128
    %p130 = scmp.eq.s32.totalorder %s20, 0
    %p131 = por %p129, %p130
    %s132 = ssub.s32 %s14, %s21
    %p133 = scmp.eq.s32.totalorder %s132, 0
    %s135 = sadd.s32 %s134, 1
    %s136 = scalar_select %p133, %s134, %s135
    %p139 = pneg %p133
    %p140 = scmp.eq.s32.totalorder %s14, 1
    %p141 = por %p139, %p140
    %p142 = scmp.ne.s32.totalorder %s134, %s137
    %p143 = scmp.eq.s32.totalorder %s14, 0
    %p144 = por %p142, %p143
    %p145 = scmp.ne.s32.totalorder %s134, %s137
    %p146 = scmp.eq.s32.totalorder %s19, 1
    %p147 = por %p145, %p146
    %p148 = scmp.ne.s32.totalorder %s137, %s138
    %p149 = scmp.eq.s32.totalorder %s19, 0
    %p150 = por %p148, %p149
    %p151 = scmp.ne.s32.totalorder %s137, %s138
    %p152 = scmp.eq.s32.totalorder %s20, 1
    %p153 = por %p151, %p152
    %p155 = scmp.ne.s32.totalorder %s138, %s154
    %p156 = scmp.eq.s32.totalorder %s20, 0
    %p157 = por %p155, %p156
    %s159 = sadd.s32 %s158, 1
    %p162 = scmp.eq.s32.totalorder %s14, 1
    %p163 = scmp.ne.s32.totalorder %s158, %s160
    %p164 = scmp.eq.s32.totalorder %s14, 0
    %p165 = por %p163, %p164
    %p166 = scmp.ne.s32.totalorder %s158, %s160
    %p167 = scmp.eq.s32.totalorder %s19, 1
    %p168 = por %p166, %p167
    %p169 = scmp.ne.s32.totalorder %s160, %s161
    %p170 = scmp.eq.s32.totalorder %s19, 0
    %p171 = por %p169, %p170
    %p172 = scmp.ne.s32.totalorder %s160, %s161
    %p173 = scmp.eq.s32.totalorder %s20, 1
    %p174 = por %p172, %p173
    %p176 = scmp.ne.s32.totalorder %s161, %s175
    %p177 = scmp.eq.s32.totalorder %s20, 0
    %p178 = por %p176, %p177
    %s180 = sadd.s32 %s179, 1
    %p183 = scmp.eq.s32.totalorder %s14, 1
    %p184 = scmp.ne.s32.totalorder %s179, %s181
    %p185 = scmp.eq.s32.totalorder %s14, 0
    %p186 = por %p184, %p185
    %p187 = scmp.ne.s32.totalorder %s179, %s181
    %p188 = scmp.eq.s32.totalorder %s19, 1
    %p189 = por %p187, %p188
    %p190 = scmp.ne.s32.totalorder %s181, %s182
    %p191 = scmp.eq.s32.totalorder %s19, 0
    %p192 = por %p190, %p191
    %p193 = scmp.ne.s32.totalorder %s181, %s182
    %p194 = scmp.eq.s32.totalorder %s20, 1
    %p195 = por %p193, %p194
    %p197 = scmp.ne.s32.totalorder %s182, %s196
    %p198 = scmp.eq.s32.totalorder %s20, 0
    %p199 = por %p197, %p198
    %p200 = scmp.le.s32.totalorder 1, %s14
    %p201 = scmp.lt.s32.totalorder %s14, 3
    %p202 = pnand %p200, %p201
    %p203 = pneg %p202
    // Predicated region
    $region9: #{_lambda_.3} parent=5 // pred_check
      _
    $region10: #{_lambda_.3} parent=5 // pred_check_branch
      %205 = sbr.rel (%p202) target = $region12
    $region11: #{_lambda_.3} parent=5 // pred_region
      %s206 = ssub.s32 %s14, 1
      // Predicated region
      $region13: #{_lambda_.3} parent=11 // pred_check
        %p207 = pneg %p61
      $region14: #{_lambda_.3} parent=11 // pred_check_branch
        %209 = sbr.rel (%p207) target = $region16
      $region15: #{_lambda_.3} parent=11 // pred_region
        _
      $region16: #{_lambda_.3} parent=11 // pred_fallthru
        _
      // Predicated region
      $region17: #{_lambda_.3} parent=11 // pred_check
        %p210 = pneg %p82
      $region18: #{_lambda_.3} parent=11 // pred_check_branch
        %212 = sbr.rel (%p210) target = $region20
      $region19: #{_lambda_.3} parent=11 // pred_region
        _
      $region20: #{_lambda_.3} parent=11 // pred_fallthru
        _
      // Predicated region
      $region21: #{_lambda_.3} parent=11 // pred_check
        %p213 = pneg %p103
      $region22: #{_lambda_.3} parent=11 // pred_check_branch
        %215 = sbr.rel (%p213) target = $region24
      $region23: #{_lambda_.3} parent=11 // pred_region
        _
      $region24: #{_lambda_.3} parent=11 // pred_fallthru
        _
      // Predicated region
      $region25: #{_lambda_.3} parent=11 // pred_check
        %p216 = pneg %p124
      $region26: #{_lambda_.3} parent=11 // pred_check_branch
        %218 = sbr.rel (%p216) target = $region28
      $region27: #{_lambda_.3} parent=11 // pred_region
        _
      $region28: #{_lambda_.3} parent=11 // pred_fallthru
        _
    $region12: #{_lambda_.3} parent=5 // pred_fallthru
      _
    %p219 = scmp.lt.s32.totalorder %s14, 2
    // Predicated region
    $region29: #{_lambda_.3} parent=5 // pred_check
      %p220 = pneg %p219
    $region30: #{_lambda_.3} parent=5 // pred_check_branch
      %222 = sbr.rel (%p220) target = $region32
    $region31: #{_lambda_.3} parent=5 // pred_region
      // Predicated region
      $region33: #{_lambda_.3} parent=31 // pred_check
        %p223 = pneg %p34
      $region34: #{_lambda_.3} parent=31 // pred_check_branch
        %225 = sbr.rel (%p223) target = $region36
      $region35: #{_lambda_.3} parent=31 // pred_region
        %p226 = scmp.lt.s32.totalorder %s14, 1
        %s227 = scalar_select %p226, %s14, 1
        %s228 = smul.addr %s227, 8
        %s229 = smul.addr %s228, 4
        %s230 = scalar_lea.vmem %s0, %s229
      $region36: #{_lambda_.3} parent=31 // pred_fallthru
        _
    $region32: #{_lambda_.3} parent=5 // pred_fallthru
      _
    %p231 = scmp.le.s32.totalorder 1, %s14
    %p232 = scmp.lt.s32.totalorder %s14, 3
    %p233 = pnand %p231, %p232
    %p234 = pneg %p233
    // Predicated region
    $region37: #{_lambda_.3} parent=5 // pred_check
      _
    $region38: #{_lambda_.3} parent=5 // pred_check_branch
      %236 = sbr.rel (%p233) target = $region40
    $region39: #{_lambda_.3} parent=5 // pred_region
      %s237 = ssub.s32 %s14, 1
      %p238 = scmp.lt.s32.totalorder %s19, 1
      %s239 = scalar_select %p238, %s19, 1
      %s240 = smul.addr %s239, 8
      %s241 = smul.addr %s240, 4
      %s242 = scalar_lea.vmem %s0, %s241
      %p243 = pneg %p40
      %p244 = pneg %p37
      %p245 = pneg %p61
      %p246 = pneg %p58
      %p247 = pneg %p82
      %p248 = pneg %p79
      %p249 = pneg %p103
      %p250 = pneg %p100
      %p251 = pneg %p124
      %p252 = pneg %p121
      %p253 = pneg %p150
      %p254 = pneg %p147
      %p255 = scmp.lt.s32.totalorder %s19, 1
      %s256 = scalar_select %p255, %s19, 1
      %s257 = smul.addr %s256, 4
      %s258 = smul.addr %s257, 4
      %s259 = scalar_lea.vmem %s5, %s258
      %p260 = pneg %p171
      %p261 = pneg %p168
      %p262 = pneg %p192
      %p263 = pneg %p189
      %p264 = scmp.lt.s32.totalorder %s19, 1
      %s265 = scalar_select %p264, %s19, 1
      %s266 = smul.addr %s265, 8
      %s267 = smul.addr %s266, 4
      %s268 = scalar_lea.vmem %s0, %s267
      %p269 = scmp.lt.s32.totalorder %s19, 1
      %s270 = scalar_select %p269, %s19, 1
      %s271 = smul.addr %s270, 4
      %s272 = smul.addr %s271, 4
      %s273 = scalar_lea.vmem %s5, %s272
      %p275 = scmp.eq.s32.totalorder %s19, 0
      // Predicated region
      $region41: #{_lambda_.3} parent=39 // pred_check
        %p276 = pneg %p275
      $region42: #{_lambda_.3} parent=39 // pred_check_branch
        %278 = sbr.rel (%p276) target = $region44
      $region43: #{_lambda_.3} parent=39 // pred_region
        %vm279 = vcmask 253952
        %280 = vst.msk [vmem:[%s6] sm:$0x1] %vm279, 0.0
        %281 = vst.msk [vmem:[%s7] sm:$0x1] %vm279, 0.0
      $region44: #{_lambda_.3} parent=39 // pred_fallthru
        _
      %vm282 = vcmask 31744
      %283 = vst.msk [vmem:[#allocation2] sm:$0xff] %vm282, 0.0
      %284 = vst.msk [vmem:[#allocation2 + $0x8] sm:$0xff] %vm282, 0.0
      %285 = vst.msk [vmem:[#allocation2 + $0x10] sm:$0xff] %vm282, 0.0
      %286 = vst.msk [vmem:[#allocation2 + $0x18] sm:$0xff] %vm282, 0.0
      %287 = vst.msk [vmem:[#allocation2 + $0x20] sm:$0xff] %vm282, 0.0
      %288 = vst.msk [vmem:[#allocation2 + $0x28] sm:$0xff] %vm282, 0.0
      %289 = vst.msk [vmem:[#allocation2 + $0x30] sm:$0xff] %vm282, 0.0
      %290 = vst.msk [vmem:[#allocation2 + $0x38] sm:$0xff] %vm282, 0.0
      %291 = vst.msk [vmem:[#allocation2 + $0x40] sm:$0xff] %vm282, 0.0
      %v292 = vld [vmem:[%s268] sm:$0xf]
      %v293 = vld [vmem:[%s268 + $0x4] sm:$0xf]
      %v294 = vld [vmem:[%s268 + $0x8] sm:$0xf]
      %v295 = vld [vmem:[%s268 + $0xc] sm:$0xf]
      %v296 = vld [vmem:[%s268 + $0x10] sm:$0xf]
      %v297 = vld [vmem:[%s268 + $0x14] sm:$0xf]
      %v298 = vld [vmem:[%s268 + $0x18] sm:$0xf]
      %v299 = vld [vmem:[%s268 + $0x1c] sm:$0xf]
      %v300 = vunpack.c.l.bf16 %v292
      %v301 = vunpack.c.l.bf16 %v293
      %v302 = vunpack.c.l.bf16 %v294
      %v303 = vunpack.c.l.bf16 %v295
      %v304 = vunpack.c.l.bf16 %v296
      %v305 = vunpack.c.l.bf16 %v297
      %v306 = vunpack.c.l.bf16 %v298
      %v307 = vunpack.c.l.bf16 %v299
      %v308 = vld [vmem:[%s3] sm:$0x1]
      %v310 = vlaneseq
      %v311 = vshrl.u32 %v310, 7
      %v312 = vsub.s32 0, %v311
      %v313 = vrot.slane %v308, %v312
      %v315 = vmul.f32 %v300, %v313
      %v316 = vmul.f32 %v301, %v313
      %v317 = vmul.f32 %v302, %v313
      %v318 = vmul.f32 %v303, %v313
      %v319 = vmul.f32 %v304, %v313
      %v320 = vmul.f32 %v305, %v313
      %v321 = vmul.f32 %v306, %v313
      %v322 = vmul.f32 %v307, %v313
      %v323 = vld [vmem:[%s4] sm:$0x1]
      %v325 = vlaneseq
      %v326 = vshrl.u32 %v325, 7
      %v327 = vsub.s32 0, %v326
      %v328 = vrot.slane %v323, %v327
      %v330 = vadd.f32 %v315, %v328
      %v331 = vadd.f32 %v316, %v328
      %v332 = vadd.f32 %v317, %v328
      %v333 = vadd.f32 %v318, %v328
      %v334 = vadd.f32 %v319, %v328
      %v335 = vadd.f32 %v320, %v328
      %v336 = vadd.f32 %v321, %v328
      %v337 = vadd.f32 %v322, %v328
      %338 = vst.msk [vmem:[#allocation2 + $0x1] sm:$0xff] %vm282, %v330
      %339 = vst.msk [vmem:[#allocation2 + $0x9] sm:$0xff] %vm282, %v331
      %340 = vst.msk [vmem:[#allocation2 + $0x11] sm:$0xff] %vm282, %v332
      %341 = vst.msk [vmem:[#allocation2 + $0x19] sm:$0xff] %vm282, %v333
      %342 = vst.msk [vmem:[#allocation2 + $0x21] sm:$0xff] %vm282, %v334
      %343 = vst.msk [vmem:[#allocation2 + $0x29] sm:$0xff] %vm282, %v335
      %344 = vst.msk [vmem:[#allocation2 + $0x31] sm:$0xff] %vm282, %v336
      %345 = vst.msk [vmem:[#allocation2 + $0x39] sm:$0xff] %vm282, %v337
      %v346 = vld [vmem:[#allocation2] ss:$2 sm:$0xff]
      %s347 = scalar_lea.vmem [#allocation2], 16
      %v348 = vld [vmem:[%s347] ss:$2 sm:$0xff]
      %s349 = scalar_lea.vmem [#allocation2], 32
      %v350 = vld [vmem:[%s349] ss:$2 sm:$0xff]
      %s351 = scalar_lea.vmem [#allocation2], 48
      %v352 = vld [vmem:[%s351] ss:$2 sm:$0xff]
      %v353 = vpack.c.bf16 %v348, %v346
      %v354 = vpack.c.bf16 %v352, %v350
      %v355 = vld [vmem:[%s1] sm:$0x3]
      %s356 = scalar_lea.vmem [#allocation2], 1
      %v357 = vld [vmem:[%s356] ss:$2 sm:$0xff]
      %s358 = scalar_lea.vmem [#allocation2], 17
      %v359 = vld [vmem:[%s358] ss:$2 sm:$0xff]
      %s360 = scalar_lea.vmem [#allocation2], 33
      %v361 = vld [vmem:[%s360] ss:$2 sm:$0xff]
      %s362 = scalar_lea.vmem [#allocation2], 49
      %v363 = vld [vmem:[%s362] ss:$2 sm:$0xff]
      %v364 = vpack.c.bf16 %v359, %v357
      %v365 = vpack.c.bf16 %v363, %v361
      %s366 = scalar_lea.vmem %s1, 2
      %v367 = vld [vmem:[%s366] sm:$0x3]
      %v369 = vsel %vm282, %v364, 0
      %v372 = vsel %vm282, %v365, 0
      %vm374 = vcmask 1041408
      %v376 = vsel %vm374, %v367, 0
      %378 = vmatprep.subr.bf16.mxu0 0
      %379 = vmatpush1.bf16.msra.mxu0 %v376
      %380 = vmatprep.subr.bf16.mxu0 0
      %381 = vmatpush1.bf16.msra.mxu0 0
      %382 = vmatprep.subr.bf16.mxu0 0
      %383 = vmatpush1.bf16.msra.mxu0 0
      %384 = vmatprep.subr.bf16.mxu0 0
      %385 = vmatpush1.bf16.msra.mxu0 0
      %386 = vmatprep.subr.bf16.mxu0 0
      %387 = vmatpush1.bf16.msra.mxu0 0
      %388 = vmatprep.subr.bf16.mxu0 0
      %389 = vmatpush1.bf16.msra.mxu0 0
      %390 = vmatprep.subr.bf16.mxu0 0
      %391 = vmatpush1.bf16.msra.mxu0 0
      %392 = vmatprep.subr.bf16.mxu0 0
      %393 = vmatpush1.bf16.msra.mxu0 0
      %394 = vmatprep.subr.bf16.mxu0 0
      %395 = vmatpush1.bf16.msra.mxu0 0
      %396 = vmatprep.subr.bf16.mxu0 0
      %397 = vmatpush1.bf16.msra.mxu0 0
      %398 = vmatprep.subr.bf16.mxu0 0
      %399 = vmatpush1.bf16.msra.mxu0 0
      %400 = vmatprep.subr.bf16.mxu0 0
      %401 = vmatpush1.bf16.msra.mxu0 0
      %402 = vmatprep.subr.bf16.mxu0 0
      %403 = vmatpush1.bf16.msra.mxu0 0
      %404 = vmatprep.subr.bf16.mxu0 0
      %405 = vmatpush1.bf16.msra.mxu0 0
      %406 = vmatprep.subr.bf16.mxu0 0
      %407 = vmatpush1.bf16.msra.mxu0 0
      %408 = vmatprep.subr.bf16.mxu0 0
      %409 = vmatpush1.bf16.msra.mxu0 0
      %410 = vmatprep.mubr.bf16.mxu0 0
      %411 = vmatmul.mubr.bf16.gmra.mrb[0].mxu0 %v369
      %v412 = vpop.f32.mrb[0].mxu0
      %v413 = vadd.f32 0.0, %v412
      %v414 = vpop.f32.mrb[0].mxu0
      %v415 = vpop.f32.mrb[0].mxu0
      %v416 = vadd.f32 0.0, %v415
      %v417 = vpop.f32.mrb[0].mxu0
      %418 = vmatprep.mubr.bf16.mxu0 0
      %419 = vmatmul.mubr.bf16.gmra.mrb[0].mxu0 %v372
      %v420 = vpop.f32.mrb[0].mxu0
      %v421 = vadd.f32 0.0, %v420
      %v422 = vpop.f32.mrb[0].mxu0
      %v423 = vpop.f32.mrb[0].mxu0
      %v424 = vadd.f32 0.0, %v423
      %v425 = vpop.f32.mrb[0].mxu0
      %426 = vdwg.mxu0
      %v428 = vsel %vm282, %v353, 0
      %v431 = vsel %vm282, %v354, 0
      %v434 = vsel %vm374, %v355, 0
      %436 = vmatprep.subr.bf16.mxu0 0
      %437 = vmatpush1.bf16.msra.mxu0 %v434
      %438 = vmatprep.subr.bf16.mxu0 0
      %439 = vmatpush1.bf16.msra.mxu0 0
      %440 = vmatprep.subr.bf16.mxu0 0
      %441 = vmatpush1.bf16.msra.mxu0 0
      %442 = vmatprep.subr.bf16.mxu0 0
      %443 = vmatpush1.bf16.msra.mxu0 0
      %444 = vmatprep.subr.bf16.mxu0 0
      %445 = vmatpush1.bf16.msra.mxu0 0
      %446 = vmatprep.subr.bf16.mxu0 0
      %447 = vmatpush1.bf16.msra.mxu0 0
      %448 = vmatprep.subr.bf16.mxu0 0
      %449 = vmatpush1.bf16.msra.mxu0 0
      %450 = vmatprep.subr.bf16.mxu0 0
      %451 = vmatpush1.bf16.msra.mxu0 0
      %452 = vmatprep.subr.bf16.mxu0 0
      %453 = vmatpush1.bf16.msra.mxu0 0
      %454 = vmatprep.subr.bf16.mxu0 0
      %455 = vmatpush1.bf16.msra.mxu0 0
      %456 = vmatprep.subr.bf16.mxu0 0
      %457 = vmatpush1.bf16.msra.mxu0 0
      %458 = vmatprep.subr.bf16.mxu0 0
      %459 = vmatpush1.bf16.msra.mxu0 0
      %460 = vmatprep.subr.bf16.mxu0 0
      %461 = vmatpush1.bf16.msra.mxu0 0
      %462 = vmatprep.subr.bf16.mxu0 0
      %463 = vmatpush1.bf16.msra.mxu0 0
      %464 = vmatprep.subr.bf16.mxu0 0
      %465 = vmatpush1.bf16.msra.mxu0 0
      %466 = vmatprep.subr.bf16.mxu0 0
      %467 = vmatpush1.bf16.msra.mxu0 0
      %468 = vmatprep.mubr.bf16.mxu0 0
      %469 = vmatmul.mubr.bf16.gmra.mrb[0].mxu0 %v428
      %v470 = vpop.f32.mrb[0].mxu0
      %v471 = vadd.f32 %v413, %v470
      %v472 = vpop.f32.mrb[0].mxu0
      %v473 = vpop.f32.mrb[0].mxu0
      %v474 = vadd.f32 %v416, %v473
      %v475 = vpop.f32.mrb[0].mxu0
      %476 = vmatprep.mubr.bf16.mxu0 0
      %477 = vmatmul.mubr.bf16.gmra.mrb[0].mxu0 %v431
      %v478 = vpop.f32.mrb[0].mxu0
      %v479 = vadd.f32 %v421, %v478
      %v480 = vpop.f32.mrb[0].mxu0
      %v481 = vpop.f32.mrb[0].mxu0
      %v482 = vadd.f32 %v424, %v481
      %v483 = vpop.f32.mrb[0].mxu0
      %484 = vdwg.mxu0
      %s485 = scalar_lea.vmem [#allocation2], 2
      %v486 = vld [vmem:[%s485] ss:$2 sm:$0xff]
      %s487 = scalar_lea.vmem [#allocation2], 18
      %v488 = vld [vmem:[%s487] ss:$2 sm:$0xff]
      %s489 = scalar_lea.vmem [#allocation2], 34
      %v490 = vld [vmem:[%s489] ss:$2 sm:$0xff]
      %s491 = scalar_lea.vmem [#allocation2], 50
      %v492 = vld [vmem:[%s491] ss:$2 sm:$0xff]
      %v493 = vpack.c.bf16 %v488, %v486
      %v494 = vpack.c.bf16 %v492, %v490
      %s495 = scalar_lea.vmem %s1, 4
      %v496 = vld [vmem:[%s495] sm:$0x3]
      %v498 = vsel %vm282, %v493, 0
      %v501 = vsel %vm282, %v494, 0
      %v504 = vsel %vm374, %v496, 0
      %506 = vmatprep.subr.bf16.mxu0 0
      %507 = vmatpush1.bf16.msra.mxu0 %v504
      %508 = vmatprep.subr.bf16.mxu0 0
      %509 = vmatpush1.bf16.msra.mxu0 0
      %510 = vmatprep.subr.bf16.mxu0 0
      %511 = vmatpush1.bf16.msra.mxu0 0
      %512 = vmatprep.subr.bf16.mxu0 0
      %513 = vmatpush1.bf16.msra.mxu0 0
      %514 = vmatprep.subr.bf16.mxu0 0
      %515 = vmatpush1.bf16.msra.mxu0 0
      %516 = vmatprep.subr.bf16.mxu0 0
      %517 = vmatpush1.bf16.msra.mxu0 0
      %518 = vmatprep.subr.bf16.mxu0 0
      %519 = vmatpush1.bf16.msra.mxu0 0
      %520 = vmatprep.subr.bf16.mxu0 0
      %521 = vmatpush1.bf16.msra.mxu0 0
      %522 = vmatprep.subr.bf16.mxu0 0
      %523 = vmatpush1.bf16.msra.mxu0 0
      %524 = vmatprep.subr.bf16.mxu0 0
      %525 = vmatpush1.bf16.msra.mxu0 0
      %526 = vmatprep.subr.bf16.mxu0 0
      %527 = vmatpush1.bf16.msra.mxu0 0
      %528 = vmatprep.subr.bf16.mxu0 0
      %529 = vmatpush1.bf16.msra.mxu0 0
      %530 = vmatprep.subr.bf16.mxu0 0
      %531 = vmatpush1.bf16.msra.mxu0 0
      %532 = vmatprep.subr.bf16.mxu0 0
      %533 = vmatpush1.bf16.msra.mxu0 0
      %534 = vmatprep.subr.bf16.mxu0 0
      %535 = vmatpush1.bf16.msra.mxu0 0
      %536 = vmatprep.subr.bf16.mxu0 0
      %537 = vmatpush1.bf16.msra.mxu0 0
      %538 = vmatprep.mubr.bf16.mxu0 0
      %539 = vmatmul.mubr.bf16.gmra.mrb[0].mxu0 %v498
      %v540 = vpop.f32.mrb[0].mxu0
      %v541 = vadd.f32 0.0, %v540
      %v542 = vpop.f32.mrb[0].mxu0
      %v543 = vpop.f32.mrb[0].mxu0
      %v544 = vadd.f32 0.0, %v543
      %v545 = vpop.f32.mrb[0].mxu0
      %546 = vmatprep.mubr.bf16.mxu0 0
      %547 = vmatmul.mubr.bf16.gmra.mrb[0].mxu0 %v501
      %v548 = vpop.f32.mrb[0].mxu0
      %v549 = vadd.f32 0.0, %v548
      %v550 = vpop.f32.mrb[0].mxu0
      %v551 = vpop.f32.mrb[0].mxu0
      %v552 = vadd.f32 0.0, %v551
      %v553 = vpop.f32.mrb[0].mxu0
      %554 = vdwg.mxu0
      %v555 = vadd.f32 %v471, %v541
      %v556 = vadd.f32 %v474, %v544
      %v557 = vadd.f32 %v479, %v549
      %v558 = vadd.f32 %v482, %v552
      %v559 = vld [vmem:[%s2] sm:$0x1]
      %v561 = vlaneseq
      %v562 = vshrl.u32 %v561, 7
      %v563 = vsub.s32 0, %v562
      %v564 = vrot.slane %v559, %v563
      %v566 = vadd.f32 %v555, %v564
      %v567 = vadd.f32 %v556, %v564
      %v568 = vadd.f32 %v557, %v564
      %v569 = vadd.f32 %v558, %v564
      %v570 = vmax.f32 %v566, 0.0
      %v571 = vmax.f32 %v567, 0.0
      %v572 = vmax.f32 %v568, 0.0
      %v573 = vmax.f32 %v569, 0.0
      %v574 = vpack.c.bf16 %v571, %v570
      %v575 = vpack.c.bf16 %v573, %v572
      %v578 = vunpack.c.l.b16 %v574
      %v579 = vunpack.c.h.b16 %v574
      %v580 = vunpack.c.l.b16 %v575
      %v581 = vunpack.c.h.b16 %v575
      %v582 = vpack.c.b16 %v578, %v578
      %v583 = vpack.c.b16 %v579, %v579
      %v584 = vpack.c.b16 %v580, %v580
      %v585 = vpack.c.b16 %v581, %v581
      %vm590 = vcmask 257024
      %591 = vst.msk [vmem:[%s273] sm:$0xf] %vm590, %v582
      %592 = vst.msk [vmem:[%s273 + $0x4] sm:$0xf] %vm590, %v583
      %593 = vst.msk [vmem:[%s273 + $0x8] sm:$0xf] %vm590, %v584
      %594 = vst.msk [vmem:[%s273 + $0xc] sm:$0xf] %vm590, %v585
      %v595 = vld [vmem:[%s6] sm:$0x1]
      %vm596 = vcmask 261120
      %v597 = vsel %vm596, %v570, 0.0
      %v598 = vsel %vm596, %v571, 0.0
      %v599 = vadd.f32 %v597, %v598
      %v600 = vsel %vm596, %v572, 0.0
      %v601 = vadd.f32 %v599, %v600
      %v602 = vsel %vm596, %v573, 0.0
      %v603 = vadd.f32 %v601, %v602
      %v604 = vrot.slane %v603, 4
      %v605 = vadd.f32 %v603, %v604
      %v606 = vrot.slane %v605, 2
      %v607 = vadd.f32 %v605, %v606
      %v608 = vrot.slane %v607, 1
      %v609 = vadd.f32 %v607, %v608
      %v610 = vadd.f32 %v595, %v609
      %vm611 = vcmask 253952
      %612 = vst.msk [vmem:[%s6] sm:$0x1] %vm611, %v610
      %v613 = vld [vmem:[%s7] sm:$0x1]
      %v614 = vmul.f32 %v570, %v570
      %v615 = vmul.f32 %v571, %v571
      %v616 = vmul.f32 %v572, %v572
      %v617 = vmul.f32 %v573, %v573
      %v618 = vsel %vm596, %v614, 0.0
      %v619 = vsel %vm596, %v615, 0.0
      %v620 = vadd.f32 %v618, %v619
      %v621 = vsel %vm596, %v616, 0.0
      %v622 = vadd.f32 %v620, %v621
      %v623 = vsel %vm596, %v617, 0.0
      %v624 = vadd.f32 %v622, %v623
      %v625 = vrot.slane %v624, 4
      %v626 = vadd.f32 %v624, %v625
      %v627 = vrot.slane %v626, 2
      %v628 = vadd.f32 %v626, %v627
      %v629 = vrot.slane %v628, 1
      %v630 = vadd.f32 %v628, %v629
      %v631 = vadd.f32 %v613, %v630
      %632 = vst.msk [vmem:[%s7] sm:$0x1] %vm611, %v631
      %p633 = scmp.lt.s32.totalorder %s19, 1
      %s634 = scalar_select %p633, %s19, 1
      %s635 = smul.addr %s634, 4
      %s636 = smul.addr %s635, 4
      %s637 = scalar_lea.vmem %s5, %s636
      // Predicated region
      $region45: #{_lambda_.3} parent=39 // pred_check
        %p638 = pneg %p147
      $region46: #{_lambda_.3} parent=39 // pred_check_branch
        %640 = sbr.rel (%p638) target = $region48
      $region47: #{_lambda_.3} parent=39 // pred_region
        _
      $region48: #{_lambda_.3} parent=39 // pred_fallthru
        _
      // Predicated region
      $region49: #{_lambda_.3} parent=39 // pred_check
        %p641 = pneg %p168
      $region50: #{_lambda_.3} parent=39 // pred_check_branch
        %643 = sbr.rel (%p641) target = $region52
      $region51: #{_lambda_.3} parent=39 // pred_region
        _
      $region52: #{_lambda_.3} parent=39 // pred_fallthru
        _
      // Predicated region
      $region53: #{_lambda_.3} parent=39 // pred_check
        %p644 = pneg %p189
      $region54: #{_lambda_.3} parent=39 // pred_check_branch
        %646 = sbr.rel (%p644) target = $region56
      $region55: #{_lambda_.3} parent=39 // pred_region
        _
      $region56: #{_lambda_.3} parent=39 // pred_fallthru
        _
      // Predicated region
      $region57: #{_lambda_.3} parent=39 // pred_check
        %p647 = pneg %p168
      $region58: #{_lambda_.3} parent=39 // pred_check_branch
        %649 = sbr.rel (%p647) target = $region60
      $region59: #{_lambda_.3} parent=39 // pred_region
        _
      $region60: #{_lambda_.3} parent=39 // pred_fallthru
        _
      // Predicated region
      $region61: #{_lambda_.3} parent=39 // pred_check
        %p650 = pneg %p189
      $region62: #{_lambda_.3} parent=39 // pred_check_branch
        %652 = sbr.rel (%p650) target = $region64
      $region63: #{_lambda_.3} parent=39 // pred_region
        _
      $region64: #{_lambda_.3} parent=39 // pred_fallthru
        _
    $region40: #{_lambda_.3} parent=5 // pred_fallthru
      _
    %p653 = scmp.le.s32.totalorder 2, %s14
    // Predicated region
    $region65: #{_lambda_.3} parent=5 // pred_check
      %p654 = pneg %p653
    $region66: #{_lambda_.3} parent=5 // pred_check_branch
      %656 = sbr.rel (%p654) target = $region68
    $region67: #{_lambda_.3} parent=5 // pred_region
      %s657 = ssub.s32 %s14, 2
      // Predicated region
      $region69: #{_lambda_.3} parent=67 // pred_check
        %p658 = pneg %p153
      $region70: #{_lambda_.3} parent=67 // pred_check_branch
        %660 = sbr.rel (%p658) target = $region72
      $region71: #{_lambda_.3} parent=67 // pred_region
        %p661 = scmp.lt.s32.totalorder %s20, 1
        %s662 = scalar_select %p661, %s20, 1
        %s663 = smul.addr %s662, 4
        %s664 = smul.addr %s663, 4
        %s665 = scalar_lea.vmem %s5, %s664
      $region72: #{_lambda_.3} parent=67 // pred_fallthru
        _
    $region68: #{_lambda_.3} parent=5 // pred_fallthru
      _
  $region6: #{_lambda_.3} parent=0 // loop_footer
    %s18 = sadd.s32 1, %s14
  $region7: #{_lambda_.3} parent=0 // loop_footer_branch
    %13 = sbr.rel target = $region3
  $region8: #{_lambda_.3} parent=0 // loop_exit
    _

// kernel: _lambda_.5
$region0: #{_lambda_.5}
  #allocation0 [shape = 'u32[]', space=smem, size = 0x4, offset = 0x4, fixed_abs, tag = 'smem constant byte address 0x4 - core index']
  #allocation1 [shape = 'u32[144,128]{1,0:T(1,128)}', space=vmem, size = 0x12000, scoped, tag = 'internal scratch']
  #allocation2 [shape = 'f32[24,32]{1,0:T(8,128)}', space=vmem, size = 0x3000, scoped, tag = 'scratch operand']
  %s0 = inlined_call_operand.vmem [shape: bf16[2,16,32], index: 0, kind: input, shape index: {}]
  %s1 = inlined_call_operand.vmem [shape: bf16[3,32,32], index: 1, kind: input, shape index: {}]
  %s2 = inlined_call_operand.vmem [shape: f32[1,32], index: 2, kind: input, shape index: {}]
  %s3 = inlined_call_operand.vmem [shape: f32[1,32], index: 3, kind: input, shape index: {}]
  %s4 = inlined_call_operand.vmem [shape: f32[1,32], index: 4, kind: input, shape index: {}]
  %s5 = inlined_call_operand.vmem [shape: f32[2,16,16], index: 5, kind: input, shape index: {}]
  %s6 = inlined_call_operand.vmem [shape: f32[2,16,16], index: 6, kind: output, shape index: {0}]
  %s7 = inlined_call_operand.hbm [shape: f32[1,1], index: 7, kind: output, shape index: {1}]
  %8 = xla_tuple %s6, %s7
  %s9 = sld [smem:[#allocation0]]
  $region69: #{_lambda_.5} parent=0
    _
  %s11 = ssub.s32 1, %s9
  %s12 = scalar_select 0, %s11, %s9
  $region1: #{_lambda_.5} parent=0
    #allocation3 [shape = 'u8[512]{0}', space=vmem, size = 0x400, scoped, tag = 'output window, operand 1, single buffered']
    #allocation4 [shape = 's32[2]{0}', space=sflag, size = 0x8, scoped, tag = 'scoped memory for _lambda_.5']
    %13 = vsyncpa [#allocation4], 0
    loop: start=0, step=1, limit=4
    $region2: #{_lambda_.5} parent=1 // loop_pre_header
      _
    $region3: #{_lambda_.5} parent=1 // loop_header
      %s15 = sphi 0, %s19
      %p16 = scmp.ge.s32.totalorder %s15, 4
      %s25 = sphi 0, %s27
      %s28 = sphi 0, %s25
      %s29 = sphi 0, %s28
      %s45 = sphi 0, %s29
      %s49 = sphi 0, %s49
      %s51 = sphi 0, %s49
      %s52 = sphi 0, %s51
      %s66 = sphi 0, %s52
      %s70 = sphi 0, %s70
      %s72 = sphi 0, %s70
      %s73 = sphi 0, %s72
      %s87 = sphi 0, %s73
      %s91 = sphi 0, %s91
      %s93 = sphi 0, %s91
      %s94 = sphi 0, %s93
      %s108 = sphi 0, %s94
      %s112 = sphi 0, %s112
      %s114 = sphi 0, %s112
      %s115 = sphi 0, %s114
      %s129 = sphi 0, %s115
      %s135 = sphi 0, %s137
      %s138 = sphi 0, %s135
      %s139 = sphi 0, %s138
      %s155 = sphi 0, %s139
      %s161 = sphi 0, %s163
      %s164 = sphi 0, %s161
      %s165 = sphi 0, %s164
      %s181 = sphi 0, %s165
      %s185 = sphi 0, %s185
      %s187 = sphi 0, %s185
      %s188 = sphi 0, %s187
      %s202 = sphi 0, %s188
    $region4: #{_lambda_.5} parent=1 // loop_header_branch
      %18 = sbr.rel (%p16) target = $region8
    $region5: #{_lambda_.5} parent=1 // loop_body
      %s20 = ssub.s32 %s15, 1
      %s21 = ssub.s32 %s15, 2
      %s22 = sadd.s32 %s15, 1
      %s23 = ssub.s32 %s15, %s22
      %p24 = scmp.eq.s32.totalorder %s23, 0
      %s26 = sadd.s32 %s25, 1
      %s27 = scalar_select %p24, %s25, %s26
      %p30 = pneg %p24
      %p31 = scmp.eq.s32.totalorder %s15, 1
      %p32 = por %p30, %p31
      %p33 = scmp.ne.s32.totalorder %s25, %s28
      %p34 = scmp.eq.s32.totalorder %s15, 0
      %p35 = por %p33, %p34
      %p36 = scmp.ne.s32.totalorder %s25, %s28
      %p37 = scmp.eq.s32.totalorder %s20, 1
      %p38 = por %p36, %p37
      %p39 = scmp.ne.s32.totalorder %s28, %s29
      %p40 = scmp.eq.s32.totalorder %s20, 0
      %p41 = por %p39, %p40
      %p42 = scmp.ne.s32.totalorder %s28, %s29
      %p43 = scmp.eq.s32.totalorder %s21, 1
      %p44 = por %p42, %p43
      %p46 = scmp.ne.s32.totalorder %s29, %s45
      %p47 = scmp.eq.s32.totalorder %s21, 0
      %p48 = por %p46, %p47
      %s50 = sadd.s32 %s49, 1
      %p53 = scmp.eq.s32.totalorder %s15, 1
      %p54 = scmp.ne.s32.totalorder %s49, %s51
      %p55 = scmp.eq.s32.totalorder %s15, 0
      %p56 = por %p54, %p55
      %p57 = scmp.ne.s32.totalorder %s49, %s51
      %p58 = scmp.eq.s32.totalorder %s20, 1
      %p59 = por %p57, %p58
      %p60 = scmp.ne.s32.totalorder %s51, %s52
      %p61 = scmp.eq.s32.totalorder %s20, 0
      %p62 = por %p60, %p61
      %p63 = scmp.ne.s32.totalorder %s51, %s52
      %p64 = scmp.eq.s32.totalorder %s21, 1
      %p65 = por %p63, %p64
      %p67 = scmp.ne.s32.totalorder %s52, %s66
      %p68 = scmp.eq.s32.totalorder %s21, 0
      %p69 = por %p67, %p68
      %s71 = sadd.s32 %s70, 1
      %p74 = scmp.eq.s32.totalorder %s15, 1
      %p75 = scmp.ne.s32.totalorder %s70, %s72
      %p76 = scmp.eq.s32.totalorder %s15, 0
      %p77 = por %p75, %p76
      %p78 = scmp.ne.s32.totalorder %s70, %s72
      %p79 = scmp.eq.s32.totalorder %s20, 1
      %p80 = por %p78, %p79
      %p81 = scmp.ne.s32.totalorder %s72, %s73
      %p82 = scmp.eq.s32.totalorder %s20, 0
      %p83 = por %p81, %p82
      %p84 = scmp.ne.s32.totalorder %s72, %s73
      %p85 = scmp.eq.s32.totalorder %s21, 1
      %p86 = por %p84, %p85
      %p88 = scmp.ne.s32.totalorder %s73, %s87
      %p89 = scmp.eq.s32.totalorder %s21, 0
      %p90 = por %p88, %p89
      %s92 = sadd.s32 %s91, 1
      %p95 = scmp.eq.s32.totalorder %s15, 1
      %p96 = scmp.ne.s32.totalorder %s91, %s93
      %p97 = scmp.eq.s32.totalorder %s15, 0
      %p98 = por %p96, %p97
      %p99 = scmp.ne.s32.totalorder %s91, %s93
      %p100 = scmp.eq.s32.totalorder %s20, 1
      %p101 = por %p99, %p100
      %p102 = scmp.ne.s32.totalorder %s93, %s94
      %p103 = scmp.eq.s32.totalorder %s20, 0
      %p104 = por %p102, %p103
      %p105 = scmp.ne.s32.totalorder %s93, %s94
      %p106 = scmp.eq.s32.totalorder %s21, 1
      %p107 = por %p105, %p106
      %p109 = scmp.ne.s32.totalorder %s94, %s108
      %p110 = scmp.eq.s32.totalorder %s21, 0
      %p111 = por %p109, %p110
      %s113 = sadd.s32 %s112, 1
      %p116 = scmp.eq.s32.totalorder %s15, 1
      %p117 = scmp.ne.s32.totalorder %s112, %s114
      %p118 = scmp.eq.s32.totalorder %s15, 0
      %p119 = por %p117, %p118
      %p120 = scmp.ne.s32.totalorder %s112, %s114
      %p121 = scmp.eq.s32.totalorder %s20, 1
      %p122 = por %p120, %p121
      %p123 = scmp.ne.s32.totalorder %s114, %s115
      %p124 = scmp.eq.s32.totalorder %s20, 0
      %p125 = por %p123, %p124
      %p126 = scmp.ne.s32.totalorder %s114, %s115
      %p127 = scmp.eq.s32.totalorder %s21, 1
      %p128 = por %p126, %p127
      %p130 = scmp.ne.s32.totalorder %s115, %s129
      %p131 = scmp.eq.s32.totalorder %s21, 0
      %p132 = por %p130, %p131
      %s133 = ssub.s32 %s15, %s22
      %p134 = scmp.eq.s32.totalorder %s133, 0
      %s136 = sadd.s32 %s135, 1
      %s137 = scalar_select %p134, %s135, %s136
      %p140 = pneg %p134
      %p141 = scmp.eq.s32.totalorder %s15, 1
      %p142 = por %p140, %p141
      %p143 = scmp.ne.s32.totalorder %s135, %s138
      %p144 = scmp.eq.s32.totalorder %s15, 0
      %p145 = por %p143, %p144
      %p146 = scmp.ne.s32.totalorder %s135, %s138
      %p147 = scmp.eq.s32.totalorder %s20, 1
      %p148 = por %p146, %p147
      %p149 = scmp.ne.s32.totalorder %s138, %s139
      %p150 = scmp.eq.s32.totalorder %s20, 0
      %p151 = por %p149, %p150
      %p152 = scmp.ne.s32.totalorder %s138, %s139
      %p153 = scmp.eq.s32.totalorder %s21, 1
      %p154 = por %p152, %p153
      %p156 = scmp.ne.s32.totalorder %s139, %s155
      %p157 = scmp.eq.s32.totalorder %s21, 0
      %p158 = por %p156, %p157
      %s159 = ssub.s32 %s15, %s22
      %p160 = scmp.eq.s32.totalorder %s159, 0
      %s162 = sadd.s32 %s161, 1
      %s163 = scalar_select %p160, %s161, %s162
      %p166 = pneg %p160
      %p167 = scmp.eq.s32.totalorder %s15, 1
      %p168 = por %p166, %p167
      %p169 = scmp.ne.s32.totalorder %s161, %s164
      %p170 = scmp.eq.s32.totalorder %s15, 0
      %p171 = por %p169, %p170
      %p172 = scmp.ne.s32.totalorder %s161, %s164
      %p173 = scmp.eq.s32.totalorder %s20, 1
      %p174 = por %p172, %p173
      %p175 = scmp.ne.s32.totalorder %s164, %s165
      %p176 = scmp.eq.s32.totalorder %s20, 0
      %p177 = por %p175, %p176
      %p178 = scmp.ne.s32.totalorder %s164, %s165
      %p179 = scmp.eq.s32.totalorder %s21, 1
      %p180 = por %p178, %p179
      %p182 = scmp.ne.s32.totalorder %s165, %s181
      %p183 = scmp.eq.s32.totalorder %s21, 0
      %p184 = por %p182, %p183
      %s186 = sadd.s32 %s185, 1
      %p189 = scmp.eq.s32.totalorder %s15, 1
      %p190 = scmp.ne.s32.totalorder %s185, %s187
      %p191 = scmp.eq.s32.totalorder %s15, 0
      %p192 = por %p190, %p191
      %p193 = scmp.ne.s32.totalorder %s185, %s187
      %p194 = scmp.eq.s32.totalorder %s20, 1
      %p195 = por %p193, %p194
      %p196 = scmp.ne.s32.totalorder %s187, %s188
      %p197 = scmp.eq.s32.totalorder %s20, 0
      %p198 = por %p196, %p197
      %p199 = scmp.ne.s32.totalorder %s187, %s188
      %p200 = scmp.eq.s32.totalorder %s21, 1
      %p201 = por %p199, %p200
      %p203 = scmp.ne.s32.totalorder %s188, %s202
      %p204 = scmp.eq.s32.totalorder %s21, 0
      %p205 = por %p203, %p204
      %p206 = scmp.le.s32.totalorder 1, %s15
      %p207 = scmp.lt.s32.totalorder %s15, 3
      %p208 = pnand %p206, %p207
      %p209 = pneg %p208
      // Predicated region
      $region9: #{_lambda_.5} parent=5 // pred_check
        _
      $region10: #{_lambda_.5} parent=5 // pred_check_branch
        %211 = sbr.rel (%p208) target = $region12
      $region11: #{_lambda_.5} parent=5 // pred_region
        %s212 = ssub.s32 %s15, 1
        // Predicated region
        $region13: #{_lambda_.5} parent=11 // pred_check
          %p213 = pneg %p62
        $region14: #{_lambda_.5} parent=11 // pred_check_branch
          %215 = sbr.rel (%p213) target = $region16
        $region15: #{_lambda_.5} parent=11 // pred_region
          _
        $region16: #{_lambda_.5} parent=11 // pred_fallthru
          _
        // Predicated region
        $region17: #{_lambda_.5} parent=11 // pred_check
          %p216 = pneg %p83
        $region18: #{_lambda_.5} parent=11 // pred_check_branch
          %218 = sbr.rel (%p216) target = $region20
        $region19: #{_lambda_.5} parent=11 // pred_region
          _
        $region20: #{_lambda_.5} parent=11 // pred_fallthru
          _
        // Predicated region
        $region21: #{_lambda_.5} parent=11 // pred_check
          %p219 = pneg %p104
        $region22: #{_lambda_.5} parent=11 // pred_check_branch
          %221 = sbr.rel (%p219) target = $region24
        $region23: #{_lambda_.5} parent=11 // pred_region
          _
        $region24: #{_lambda_.5} parent=11 // pred_fallthru
          _
        // Predicated region
        $region25: #{_lambda_.5} parent=11 // pred_check
          %p222 = pneg %p125
        $region26: #{_lambda_.5} parent=11 // pred_check_branch
          %224 = sbr.rel (%p222) target = $region28
        $region27: #{_lambda_.5} parent=11 // pred_region
          _
        $region28: #{_lambda_.5} parent=11 // pred_fallthru
          _
      $region12: #{_lambda_.5} parent=5 // pred_fallthru
        _
      %p225 = scmp.lt.s32.totalorder %s15, 2
      // Predicated region
      $region29: #{_lambda_.5} parent=5 // pred_check
        %p226 = pneg %p225
      $region30: #{_lambda_.5} parent=5 // pred_check_branch
        %228 = sbr.rel (%p226) target = $region32
      $region31: #{_lambda_.5} parent=5 // pred_region
        // Predicated region
        $region33: #{_lambda_.5} parent=31 // pred_check
          %p229 = pneg %p35
        $region34: #{_lambda_.5} parent=31 // pred_check_branch
          %231 = sbr.rel (%p229) target = $region36
        $region35: #{_lambda_.5} parent=31 // pred_region
          %p232 = scmp.lt.s32.totalorder %s15, 1
          %s233 = scalar_select %p232, %s15, 1
          %s234 = smul.addr %s233, 2
          %s235 = smul.addr %s234, 4
          %s236 = scalar_lea.vmem %s0, %s235
        $region36: #{_lambda_.5} parent=31 // pred_fallthru
          _
        // Predicated region
        $region37: #{_lambda_.5} parent=31 // pred_check
          %p237 = pneg %p145
        $region38: #{_lambda_.5} parent=31 // pred_check_branch
          %239 = sbr.rel (%p237) target = $region40
        $region39: #{_lambda_.5} parent=31 // pred_region
          %p240 = scmp.lt.s32.totalorder %s15, 1
          %s241 = scalar_select %p240, %s15, 1
          %s242 = smul.addr %s241, 2
          %s243 = smul.addr %s242, 8
          %s244 = scalar_lea.vmem %s5, %s243
        $region40: #{_lambda_.5} parent=31 // pred_fallthru
          _
      $region32: #{_lambda_.5} parent=5 // pred_fallthru
        _
      %p245 = scmp.le.s32.totalorder 1, %s15
      %p246 = scmp.lt.s32.totalorder %s15, 3
      %p247 = pnand %p245, %p246
      %p248 = pneg %p247
      // Predicated region
      $region41: #{_lambda_.5} parent=5 // pred_check
        _
      $region42: #{_lambda_.5} parent=5 // pred_check_branch
        %250 = sbr.rel (%p247) target = $region44
      $region43: #{_lambda_.5} parent=5 // pred_region
        %s251 = ssub.s32 %s15, 1
        %p252 = scmp.lt.s32.totalorder %s20, 1
        %s253 = scalar_select %p252, %s20, 1
        %s254 = smul.addr %s253, 2
        %s255 = smul.addr %s254, 4
        %s256 = scalar_lea.vmem %s0, %s255
        %p257 = pneg %p41
        %p258 = pneg %p38
        %p259 = pneg %p62
        %p260 = pneg %p59
        %p261 = pneg %p83
        %p262 = pneg %p80
        %p263 = pneg %p104
        %p264 = pneg %p101
        %p265 = pneg %p125
        %p266 = pneg %p122
        %p267 = scmp.lt.s32.totalorder %s20, 1
        %s268 = scalar_select %p267, %s20, 1
        %s269 = smul.addr %s268, 2
        %s270 = smul.addr %s269, 8
        %s271 = scalar_lea.vmem %s5, %s270
        %p272 = pneg %p151
        %p273 = pneg %p148
        %p274 = pneg %p177
        %p275 = pneg %p174
        %p276 = scmp.lt.s32.totalorder %s20, 1
        %s277 = scalar_select %p276, %s20, 1
        %s278 = smul.addr %s277, 2
        %s279 = smul.addr %s278, 8
        %s280 = scalar_lea.vmem %s6, %s279
        %p281 = pneg %p198
        %p282 = pneg %p195
        %p283 = scmp.lt.s32.totalorder %s20, 1
        %s284 = scalar_select %p283, %s20, 1
        %s285 = smul.addr %s284, 2
        %s286 = smul.addr %s285, 4
        %s287 = scalar_lea.vmem %s0, %s286
        %p288 = scmp.lt.s32.totalorder %s20, 1
        %s289 = scalar_select %p288, %s20, 1
        %s290 = smul.addr %s289, 2
        %s291 = smul.addr %s290, 8
        %s292 = scalar_lea.vmem %s5, %s291
        %p293 = scmp.lt.s32.totalorder %s20, 1
        %s294 = scalar_select %p293, %s20, 1
        %s295 = smul.addr %s294, 2
        %s296 = smul.addr %s295, 8
        %s297 = scalar_lea.vmem %s6, %s296
        %p299 = scmp.eq.s32.totalorder %s20, 0
        // Predicated region
        $region45: #{_lambda_.5} parent=43 // pred_check
          %p300 = pneg %p299
        $region46: #{_lambda_.5} parent=43 // pred_check_branch
          %302 = sbr.rel (%p300) target = $region48
        $region47: #{_lambda_.5} parent=43 // pred_region
          %vm303 = vcmask 0
          %304 = vst.msk [vmem:[#allocation3] sm:$0x1] %vm303, 0.0
        $region48: #{_lambda_.5} parent=43 // pred_fallthru
          _
        %vm305 = vcmask 261120
        %306 = vst.msk [vmem:[#allocation2] sm:$0xff] %vm305, 0.0
        %307 = vst.msk [vmem:[#allocation2 + $0x8] sm:$0xff] %vm305, 0.0
        %308 = vst.msk [vmem:[#allocation2 + $0x10] sm:$0xff] %vm305, 0.0
        %v309 = vld [vmem:[%s287] sm:$0xf]
        %v310 = vld [vmem:[%s287 + $0x4] sm:$0xf]
        %v311 = vunpack.c.l.bf16 %v309
        %v312 = vunpack.c.l.bf16 %v310
        %v313 = vld [vmem:[%s3] sm:$0x1]
        %v315 = vlaneseq
        %v316 = vshrl.u32 %v315, 7
        %v317 = vsub.s32 0, %v316
        %v318 = vrot.slane %v313, %v317
        %v320 = vmul.f32 %v311, %v318
        %v321 = vmul.f32 %v312, %v318
        %v322 = vld [vmem:[%s4] sm:$0x1]
        %v324 = vlaneseq
        %v325 = vshrl.u32 %v324, 7
        %v326 = vsub.s32 0, %v325
        %v327 = vrot.slane %v322, %v326
        %v329 = vadd.f32 %v320, %v327
        %v330 = vadd.f32 %v321, %v327
        %331 = vst.msk [vmem:[#allocation2 + $0x1] sm:$0xff] %vm305, %v329
        %332 = vst.msk [vmem:[#allocation2 + $0x9] sm:$0xff] %vm305, %v330
        %v333 = vld [vmem:[#allocation2] sm:$0xff]
        %v334 = vld [vmem:[#allocation2 + $0x8] sm:$0xff]
        %v335 = vpack.c.bf16 %v334, %v333
        %v336 = vld [vmem:[%s1] sm:$0xf]
        %v337 = vld [vmem:[%s1 + $0x4] sm:$0xf]
        %v338 = vld [vmem:[%s1 + $0x8] sm:$0xf]
        %v339 = vld [vmem:[%s1 + $0xc] sm:$0xf]
        %v340 = vld [vmem:[#allocation2 + $0x1] sm:$0xff]
        %v341 = vld [vmem:[#allocation2 + $0x9] sm:$0xff]
        %v342 = vpack.c.bf16 %v341, %v340
        %s343 = scalar_lea.vmem %s1, 16
        %v344 = vld [vmem:[%s343] sm:$0xf]
        %v345 = vld [vmem:[%s343 + $0x4] sm:$0xf]
        %v346 = vld [vmem:[%s343 + $0x8] sm:$0xf]
        %v347 = vld [vmem:[%s343 + $0xc] sm:$0xf]
        %v352 = vunpack.c.l.b16 %v344
        %v353 = vunpack.c.l.b16 %v345
        %v354 = vunpack.c.l.b16 %v346
        %v355 = vunpack.c.l.b16 %v347
        %v356 = vpack.c.b16 %v353, %v352
        %v357 = vpack.c.b16 %v355, %v354
        %v361 = vsel %vm305, %v342, 0
        %363 = vmatprep.subr.bf16.mxu0 0
        %364 = vmatpush1.bf16.msra.mxu0 %v356
        %365 = vmatprep.subr.bf16.mxu0 0
        %366 = vmatpush1.bf16.msra.mxu0 %v357
        %367 = vmatprep.subr.bf16.mxu0 0
        %368 = vmatpush1.bf16.msra.mxu0 0
        %369 = vmatprep.subr.bf16.mxu0 0
        %370 = vmatpush1.bf16.msra.mxu0 0
        %371 = vmatprep.subr.bf16.mxu0 0
        %372 = vmatpush1.bf16.msra.mxu0 0
        %373 = vmatprep.subr.bf16.mxu0 0
        %374 = vmatpush1.bf16.msra.mxu0 0
        %375 = vmatprep.subr.bf16.mxu0 0
        %376 = vmatpush1.bf16.msra.mxu0 0
        %377 = vmatprep.subr.bf16.mxu0 0
        %378 = vmatpush1.bf16.msra.mxu0 0
        %379 = vmatprep.subr.bf16.mxu0 0
        %380 = vmatpush1.bf16.msra.mxu0 0
        %381 = vmatprep.subr.bf16.mxu0 0
        %382 = vmatpush1.bf16.msra.mxu0 0
        %383 = vmatprep.subr.bf16.mxu0 0
        %384 = vmatpush1.bf16.msra.mxu0 0
        %385 = vmatprep.subr.bf16.mxu0 0
        %386 = vmatpush1.bf16.msra.mxu0 0
        %387 = vmatprep.subr.bf16.mxu0 0
        %388 = vmatpush1.bf16.msra.mxu0 0
        %389 = vmatprep.subr.bf16.mxu0 0
        %390 = vmatpush1.bf16.msra.mxu0 0
        %391 = vmatprep.subr.bf16.mxu0 0
        %392 = vmatpush1.bf16.msra.mxu0 0
        %393 = vmatprep.subr.bf16.mxu0 0
        %394 = vmatpush1.bf16.msra.mxu0 0
        %395 = vmatprep.mubr.bf16.mxu0 0
        %396 = vmatmul.mubr.bf16.gmra.mrb[0].mxu0 %v361
        %v397 = vpop.f32.mrb[0].mxu0
        %v398 = vadd.f32 0.0, %v397
        %v399 = vpop.f32.mrb[0].mxu0
        %v400 = vpop.f32.mrb[0].mxu0
        %v401 = vadd.f32 0.0, %v400
        %v402 = vpop.f32.mrb[0].mxu0
        %403 = vdwg.mxu0
        %v408 = vunpack.c.l.b16 %v336
        %v409 = vunpack.c.l.b16 %v337
        %v410 = vunpack.c.l.b16 %v338
        %v411 = vunpack.c.l.b16 %v339
        %v412 = vpack.c.b16 %v409, %v408
        %v413 = vpack.c.b16 %v411, %v410
        %v417 = vsel %vm305, %v335, 0
        %419 = vmatprep.subr.bf16.mxu0 0
        %420 = vmatpush1.bf16.msra.mxu0 %v412
        %421 = vmatprep.subr.bf16.mxu0 0
        %422 = vmatpush1.bf16.msra.mxu0 %v413
        %423 = vmatprep.subr.bf16.mxu0 0
        %424 = vmatpush1.bf16.msra.mxu0 0
        %425 = vmatprep.subr.bf16.mxu0 0
        %426 = vmatpush1.bf16.msra.mxu0 0
        %427 = vmatprep.subr.bf16.mxu0 0
        %428 = vmatpush1.bf16.msra.mxu0 0
        %429 = vmatprep.subr.bf16.mxu0 0
        %430 = vmatpush1.bf16.msra.mxu0 0
        %431 = vmatprep.subr.bf16.mxu0 0
        %432 = vmatpush1.bf16.msra.mxu0 0
        %433 = vmatprep.subr.bf16.mxu0 0
        %434 = vmatpush1.bf16.msra.mxu0 0
        %435 = vmatprep.subr.bf16.mxu0 0
        %436 = vmatpush1.bf16.msra.mxu0 0
        %437 = vmatprep.subr.bf16.mxu0 0
        %438 = vmatpush1.bf16.msra.mxu0 0
        %439 = vmatprep.subr.bf16.mxu0 0
        %440 = vmatpush1.bf16.msra.mxu0 0
        %441 = vmatprep.subr.bf16.mxu0 0
        %442 = vmatpush1.bf16.msra.mxu0 0
        %443 = vmatprep.subr.bf16.mxu0 0
        %444 = vmatpush1.bf16.msra.mxu0 0
        %445 = vmatprep.subr.bf16.mxu0 0
        %446 = vmatpush1.bf16.msra.mxu0 0
        %447 = vmatprep.subr.bf16.mxu0 0
        %448 = vmatpush1.bf16.msra.mxu0 0
        %449 = vmatprep.subr.bf16.mxu0 0
        %450 = vmatpush1.bf16.msra.mxu0 0
        %451 = vmatprep.mubr.bf16.mxu0 0
        %452 = vmatmul.mubr.bf16.gmra.mrb[0].mxu0 %v417
        %v453 = vpop.f32.mrb[0].mxu0
        %v454 = vadd.f32 %v398, %v453
        %v455 = vpop.f32.mrb[0].mxu0
        %v456 = vpop.f32.mrb[0].mxu0
        %v457 = vadd.f32 %v401, %v456
        %v458 = vpop.f32.mrb[0].mxu0
        %459 = vdwg.mxu0
        %v460 = vld [vmem:[#allocation2 + $0x2] sm:$0xff]
        %v461 = vld [vmem:[#allocation2 + $0xa] sm:$0xff]
        %v462 = vpack.c.bf16 %v461, %v460
        %s463 = scalar_lea.vmem %s1, 32
        %v464 = vld [vmem:[%s463] sm:$0xf]
        %v465 = vld [vmem:[%s463 + $0x4] sm:$0xf]
        %v466 = vld [vmem:[%s463 + $0x8] sm:$0xf]
        %v467 = vld [vmem:[%s463 + $0xc] sm:$0xf]
        %v472 = vunpack.c.l.b16 %v464
        %v473 = vunpack.c.l.b16 %v465
        %v474 = vunpack.c.l.b16 %v466
        %v475 = vunpack.c.l.b16 %v467
        %v476 = vpack.c.b16 %v473, %v472
        %v477 = vpack.c.b16 %v475, %v474
        %v481 = vsel %vm305, %v462, 0
        %483 = vmatprep.subr.bf16.mxu0 0
        %484 = vmatpush1.bf16.msra.mxu0 %v476
        %485 = vmatprep.subr.bf16.mxu0 0
        %486 = vmatpush1.bf16.msra.mxu0 %v477
        %487 = vmatprep.subr.bf16.mxu0 0
        %488 = vmatpush1.bf16.msra.mxu0 0
        %489 = vmatprep.subr.bf16.mxu0 0
        %490 = vmatpush1.bf16.msra.mxu0 0
        %491 = vmatprep.subr.bf16.mxu0 0
        %492 = vmatpush1.bf16.msra.mxu0 0
        %493 = vmatprep.subr.bf16.mxu0 0
        %494 = vmatpush1.bf16.msra.mxu0 0
        %495 = vmatprep.subr.bf16.mxu0 0
        %496 = vmatpush1.bf16.msra.mxu0 0
        %497 = vmatprep.subr.bf16.mxu0 0
        %498 = vmatpush1.bf16.msra.mxu0 0
        %499 = vmatprep.subr.bf16.mxu0 0
        %500 = vmatpush1.bf16.msra.mxu0 0
        %501 = vmatprep.subr.bf16.mxu0 0
        %502 = vmatpush1.bf16.msra.mxu0 0
        %503 = vmatprep.subr.bf16.mxu0 0
        %504 = vmatpush1.bf16.msra.mxu0 0
        %505 = vmatprep.subr.bf16.mxu0 0
        %506 = vmatpush1.bf16.msra.mxu0 0
        %507 = vmatprep.subr.bf16.mxu0 0
        %508 = vmatpush1.bf16.msra.mxu0 0
        %509 = vmatprep.subr.bf16.mxu0 0
        %510 = vmatpush1.bf16.msra.mxu0 0
        %511 = vmatprep.subr.bf16.mxu0 0
        %512 = vmatpush1.bf16.msra.mxu0 0
        %513 = vmatprep.subr.bf16.mxu0 0
        %514 = vmatpush1.bf16.msra.mxu0 0
        %515 = vmatprep.mubr.bf16.mxu0 0
        %516 = vmatmul.mubr.bf16.gmra.mrb[0].mxu0 %v481
        %v517 = vpop.f32.mrb[0].mxu0
        %v518 = vadd.f32 0.0, %v517
        %v519 = vpop.f32.mrb[0].mxu0
        %v520 = vpop.f32.mrb[0].mxu0
        %v521 = vadd.f32 0.0, %v520
        %v522 = vpop.f32.mrb[0].mxu0
        %523 = vdwg.mxu0
        %v524 = vadd.f32 %v454, %v518
        %v525 = vadd.f32 %v457, %v521
        %v526 = vld [vmem:[%s2] sm:$0x1]
        %v528 = vlaneseq
        %v529 = vshrl.u32 %v528, 7
        %v530 = vsub.s32 0, %v529
        %v531 = vrot.slane %v526, %v530
        %v533 = vadd.f32 %v524, %v531
        %v534 = vadd.f32 %v525, %v531
        %v535 = vmul.f32 %v533, 1.442695
        %v536 = vpow.pop %v535
        %v537 = vmul.f32 %v534, 1.442695
        %v538 = vpow.pop %v537
        %v539 = vld [vmem:[%s292] sm:$0xff]
        %v540 = vld [vmem:[%s292 + $0x8] sm:$0xff]
        %543 = vrot.lane.b32.xlu0 %v536, 112
        %v544 = vpop.permute.xlu0 %543
        %545 = vrot.lane.b32.xlu0 %v538, 112
        %v546 = vpop.permute.xlu0 %545
        %v549 = vmul.f32 %v539, %v544
        %v550 = vmul.f32 %v540, %v546
        %v551 = vadd.f32 %v549, %v533
        %v552 = vadd.f32 %v550, %v534
        %vm553 = vcmask 130048
        %554 = vst.msk [vmem:[%s297] sm:$0xff] %vm553, %v551
        %555 = vst.msk [vmem:[%s297 + $0x8] sm:$0xff] %vm553, %v552
        %v556 = vmul.f32 %v533, %v533
        %v557 = vmul.f32 %v534, %v534
        %v558 = vadd.f32 %v556, %v544
        %v559 = vadd.f32 %v557, %v546
        %562 = vrot.lane.b32.xlu0 %v533, 112
        %v563 = vpop.permute.xlu0 %562
        %564 = vrot.lane.b32.xlu0 %v534, 112
        %v565 = vpop.permute.xlu0 %564
        %v568 = vsub.f32 %v558, %v563
        %v569 = vsub.f32 %v559, %v565
        %v570 = vsub.f32 %v568, 1.0
        %v571 = vsub.f32 %v569, 1.0
        %v572 = vsel %vm553, %v570, 0.0
        %573 = vadd.xlane.f32.xlu0 %v572
        %v574 = vpop.xlane.xlu0 %573
        %v575 = vsel %vm553, %v571, 0.0
        %576 = vadd.xlane.f32.xlu0 %v575
        %v577 = vpop.xlane.xlu0 %576
        %v578 = vld [vmem:[#allocation3] sm:$0x1]
        %v579 = vadd.f32 %v574, %v577
        %v580 = vrot.slane %v579, 4
        %v581 = vadd.f32 %v579, %v580
        %v582 = vrot.slane %v581, 2
        %v583 = vadd.f32 %v581, %v582
        %v584 = vrot.slane %v583, 1
        %v585 = vadd.f32 %v583, %v584
        %v586 = vadd.f32 %v578, %v585
        %vm587 = vcmask 0
        %588 = vst.msk [vmem:[#allocation3] sm:$0x1] %vm587, %v586
        %p589 = scmp.lt.s32.totalorder %s20, 1
        %s590 = scalar_select %p589, %s20, 1
        %s591 = smul.addr %s590, 2
        %s592 = smul.addr %s591, 8
        %s593 = scalar_lea.vmem %s6, %s592
        // Predicated region
        $region49: #{_lambda_.5} parent=43 // pred_check
          %p594 = pneg %p174
        $region50: #{_lambda_.5} parent=43 // pred_check_branch
          %596 = sbr.rel (%p594) target = $region52
        $region51: #{_lambda_.5} parent=43 // pred_region
          _
        $region52: #{_lambda_.5} parent=43 // pred_fallthru
          _
        // Predicated region
        $region53: #{_lambda_.5} parent=43 // pred_check
          %p597 = pneg %p195
        $region54: #{_lambda_.5} parent=43 // pred_check_branch
          %599 = sbr.rel (%p597) target = $region56
        $region55: #{_lambda_.5} parent=43 // pred_region
          %s601 = ssub.s32 16, 16
          %602 = vsyncadd [#allocation4], %s601
          %s604 = sshll.u32 [#allocation3], 4
          %s605 = int_to_ptr.vmem [resolvable:$true] %s604
          %607 = dma.vmem_to_hbm [thread:$0]  %s605, 16, %s7, [#allocation4]
        $region56: #{_lambda_.5} parent=43 // pred_fallthru
          _
        // Predicated region
        $region57: #{_lambda_.5} parent=43 // pred_check
          %p608 = pneg %p195
        $region58: #{_lambda_.5} parent=43 // pred_check_branch
          %610 = sbr.rel (%p608) target = $region60
        $region59: #{_lambda_.5} parent=43 // pred_region
          %611 = dma.done [#allocation4], 16
        $region60: #{_lambda_.5} parent=43 // pred_fallthru
          _
      $region44: #{_lambda_.5} parent=5 // pred_fallthru
        _
      %p612 = scmp.le.s32.totalorder 2, %s15
      // Predicated region
      $region61: #{_lambda_.5} parent=5 // pred_check
        %p613 = pneg %p612
      $region62: #{_lambda_.5} parent=5 // pred_check_branch
        %615 = sbr.rel (%p613) target = $region64
      $region63: #{_lambda_.5} parent=5 // pred_region
        %s616 = ssub.s32 %s15, 2
        // Predicated region
        $region65: #{_lambda_.5} parent=63 // pred_check
          %p617 = pneg %p180
        $region66: #{_lambda_.5} parent=63 // pred_check_branch
          %619 = sbr.rel (%p617) target = $region68
        $region67: #{_lambda_.5} parent=63 // pred_region
          %p620 = scmp.lt.s32.totalorder %s21, 1
          %s621 = scalar_select %p620, %s21, 1
          %s622 = smul.addr %s621, 2
          %s623 = smul.addr %s622, 8
          %s624 = scalar_lea.vmem %s6, %s623
        $region68: #{_lambda_.5} parent=63 // pred_fallthru
          _
      $region64: #{_lambda_.5} parent=5 // pred_fallthru
        _
    $region6: #{_lambda_.5} parent=1 // loop_footer
      %s19 = sadd.s32 1, %s15
    $region7: #{_lambda_.5} parent=1 // loop_footer_branch
      %14 = sbr.rel target = $region3
    $region8: #{_lambda_.5} parent=1 // loop_exit
      _
    %625 = vsyncpa [#allocation4], 1
    %s626 = scalar_lea.sflag [#allocation4], 1
    %627 = vsyncpa %s626, 1

</llo_original>
